<compile_context>
chip_gen: v7x
topology: tpu7x:2x2x1
jax: 0.10.0
libtpu: 0.0.40
codegen_flags: <defaults>
</compile_context>

<pallas_src>
import functools

import jax
import jax.numpy as jnp
from jax.experimental import pallas as pl
from jax.experimental.pallas import tpu as pltpu

BN_EPS = 1e-5
NEG_SLOPE = 0.01  # F.leaky_relu default


def _round_up(x, m):
    return ((x + m - 1) // m) * m


def critic_kernel(state_ref, action_ref, w1_ref, w2s_ref, w2a_ref, pp_ref,
                  out_ref, sum_ref, sumsq_ref, scale_ref, shift_ref,
                  *, F1, F2, B, B_TILE, PADDED):
    p = pl.program_id(0)   # 0: BN-stats pass over all tiles, 1: value pass
    t = pl.program_id(1)   # batch tile index

    b1 = pp_ref[:F1, 0:1]

    def fc1():
        # (F1, S) contracted with (B_TILE, S) on their last dims -> (F1, B_TILE)
        # (batch on the lane axis; trans-B MXU matmul, no explicit transpose).
        return jax.lax.dot_general(
            w1_ref[...], state_ref[...],
            dimension_numbers=(((1,), (1,)), ((), ())),
            preferred_element_type=jnp.float32) + b1

    @pl.when(p == 0)
    def _stats_pass():
        @pl.when(t == 0)
        def _():
            sum_ref[...] = jnp.zeros_like(sum_ref)
            sumsq_ref[...] = jnp.zeros_like(sumsq_ref)

        xs = fc1()
        if PADDED:
            # Mask batch-padding columns so they do not pollute the BN stats.
            col = (jax.lax.broadcasted_iota(jnp.int32, (1, B_TILE), 1)
                   + t * B_TILE)
            xs = jnp.where(col < B, xs, 0.0)
        sum_ref[...] += jnp.sum(xs, axis=1, keepdims=True)
        sumsq_ref[...] += jnp.sum(xs * xs, axis=1, keepdims=True)

    @pl.when(p == 1)
    def _value_pass():
        @pl.when(t == 0)
        def _():
            # Fold full-batch stats into a per-feature affine:
            #   xs_norm = xs * scale + shift   (2 VALU ops/element, not 4).
            inv_b = jnp.float32(1.0 / B)
            mean = sum_ref[...] * inv_b
            var = jnp.maximum(sumsq_ref[...] * inv_b - mean * mean, 0.0)
            gamma = pp_ref[:F1, 1:2]
            beta = pp_ref[:F1, 2:3]
            scale = gamma * jax.lax.rsqrt(var + BN_EPS)
            scale_ref[...] = scale
            shift_ref[...] = beta - mean * scale

        xs = fc1()                                   # cheap recompute on MXU
        xs = xs * scale_ref[...] + shift_ref[...]    # BatchNorm1d (training)
        xs = jnp.maximum(xs, NEG_SLOPE * xs)         # leaky_relu, 1 VALU op

        # fc2( cat([xs, action]) )  ==  w2_state @ xs + w2_action @ action^T
        b2 = pp_ref[:F2, 3:4]
        x = jnp.dot(w2s_ref[...], xs, preferred_element_type=jnp.float32)
        x = x + jax.lax.dot_general(
            w2a_ref[...], action_ref[...],
            dimension_numbers=(((1,), (1,)), ((), ())),
            preferred_element_type=jnp.float32)
        x = x + b2
        x = jnp.maximum(x, NEG_SLOPE * x)

        # fc3 (out_features = 1): VPU multiply + cross-sublane reduce.
        # Result is the lane-dense (1, B_TILE) Q row for this tile.
        w3 = pp_ref[:F2, 4:5]
        b3 = pp_ref[0:1, 5:6]
        out_ref[...] = jnp.sum(x * w3, axis=0, keepdims=True) + b3


def pack_params(p):
    """One-time repack of math-layout params into the kernel's layout."""
    S, F1 = p["w1"].shape
    F1A, F2 = p["w2"].shape
    A = F1A - F1

    w1t = jnp.asarray(p["w1"].T, jnp.float32)        # (F1, S)
    w2s = jnp.asarray(p["w2"][:F1].T, jnp.float32)   # (F2, F1)  state half
    w2a = jnp.asarray(p["w2"][F1:].T, jnp.float32)   # (F2, A)   action half

    # Per-feature vectors + scalars packed into one small f32 array
    # (columns: b1, gamma, beta, b2, w3, b3) -> one DMA instead of six.
    PBN = max(F1, F2)
    pp = jnp.zeros((PBN, 8), jnp.float32)
    pp = pp.at[:F1, 0].set(p["b1"])
    pp = pp.at[:F1, 1].set(p["gamma"])
    pp = pp.at[:F1, 2].set(p["beta"])
    pp = pp.at[:F2, 3].set(p["b2"])
    pp = pp.at[:F2, 4].set(p["w3"].reshape(-1))
    pp = pp.at[0, 5].set(p["b3"][0])

    return {"w1t": w1t, "w2s": w2s, "w2a": w2a, "pp": pp,
            "dims": (S, A, F1, F2)}


def critic_forward(state, action, packed, *, b_tile=None):
    B = state.shape[0]
    S, A, F1, F2 = packed["dims"]

    if b_tile is None:
        b_tile = min(1024, _round_up(B, 128))
    assert b_tile % 128 == 0, "batch tile must be lane-dense (multiple of 128)"

    B_pad = _round_up(B, b_tile)
    n_tiles = B_pad // b_tile
    if B_pad != B:
        state = jnp.pad(state, ((0, B_pad - B), (0, 0)))
        action = jnp.pad(action, ((0, B_pad - B), (0, 0)))

    kernel = functools.partial(critic_kernel, F1=F1, F2=F2, B=B,
                               B_TILE=b_tile, PADDED=(B_pad != B))

    q_row = pl.pallas_call(
        kernel,
        out_shape=jax.ShapeDtypeStruct((1, B_pad), jnp.float32),
        grid=(2, n_tiles),            # (phase, batch tile); tile iterates fastest
        in_specs=[
            pl.BlockSpec((b_tile, S), lambda p, t: (t, 0)),       # state
            pl.BlockSpec((b_tile, A), lambda p, t: (t * p, 0)),   # action (phase 1 only)
            pl.BlockSpec(packed["w1t"].shape, lambda p, t: (0, 0)),
            pl.BlockSpec(packed["w2s"].shape, lambda p, t: (0, 0)),
            pl.BlockSpec(packed["w2a"].shape, lambda p, t: (0, 0)),
            pl.BlockSpec(packed["pp"].shape, lambda p, t: (0, 0)),
        ],
        # Lane-dense (1, b_tile) output tiles, only advanced during phase 1 so
        # phase 0 never writes back an untouched block.
        out_specs=pl.BlockSpec((1, b_tile), lambda p, t: (0, t * p)),
        scratch_shapes=[pltpu.VMEM((F1, 1), jnp.float32),   # partial sum
                        pltpu.VMEM((F1, 1), jnp.float32),   # partial sum-sq
                        pltpu.VMEM((F1, 1), jnp.float32),   # BN scale
                        pltpu.VMEM((F1, 1), jnp.float32)],  # BN shift
        compiler_params=pltpu.CompilerParams(
            dimension_semantics=("arbitrary", "arbitrary")),
    )(state, action, packed["w1t"], packed["w2s"], packed["w2a"], packed["pp"])

    return q_row[0, :B].reshape(B, 1)   # module's (B, 1) output shape


def init_params(key, state_size, action_size, fc1_units, fc2_units):
    """Deterministic synthetic init mirroring the PyTorch module's ranges."""
    ks = jax.random.split(key, 6)
    lim1 = 1.0 / jnp.sqrt(jnp.float32(fc1_units))  # hidden_init uses weight.size()[0]
    lim2 = 1.0 / jnp.sqrt(jnp.float32(fc2_units))
    u = lambda k, shape, lim: jax.random.uniform(k, shape, jnp.float32, -lim, lim)
    return {
        "w1": u(ks[0], (state_size, fc1_units), lim1),               # fc1.weight^T
        "b1": u(ks[1], (fc1_units,), lim1),
        "gamma": jnp.ones((fc1_units,), jnp.float32),                # BatchNorm1d affine
        "beta": jnp.zeros((fc1_units,), jnp.float32),
        "w2": u(ks[2], (fc1_units + action_size, fc2_units), lim2),  # fc2.weight^T
        "b2": u(ks[3], (fc2_units,), lim2),
        "w3": u(ks[4], (fc2_units, 1), 0.003),                       # fc3.weight^T
        "b3": u(ks[5], (1,), 1.0),
    }


def reference_forward(state, action, p):
    """Pure-JAX reference of the PyTorch forward (training-mode BN)."""
    xs = state @ p["w1"] + p["b1"]
    mean = xs.mean(0, keepdims=True)
    var = ((xs - mean) ** 2).mean(0, keepdims=True)
    xs = (xs - mean) / jnp.sqrt(var + BN_EPS) * p["gamma"] + p["beta"]
    xs = jnp.where(xs >= 0, xs, NEG_SLOPE * xs)
    x = jnp.concatenate([xs, action], axis=1) @ p["w2"] + p["b2"]
    x = jnp.where(x >= 0, x, NEG_SLOPE * x)
    return x @ p["w3"] + p["b3"]


if __name__ == "__main__":
    # Small shapes consistent with the module: Critic(state_size=16, action_size=4,
    # fc1_units=64, fc2_units=64), batch of 200 (2 lane-dense tiles of 128 + mask).
    B, STATE, ACTION, F1, F2 = 200, 16, 4, 64, 64

    key = jax.random.PRNGKey(0)
    k_state, k_action, k_params = jax.random.split(key, 3)

    state = jax.random.normal(k_state, (B, STATE), jnp.float32)
    action = jax.random.normal(k_action, (B, ACTION), jnp.float32)
    params = init_params(k_params, STATE, ACTION, F1, F2)
    packed = pack_params(params)

    # Multi-tile path (exercises cross-tile BN stats + padded-batch masking).
    q = jax.block_until_ready(critic_forward(state, action, packed, b_tile=128))
    q_ref = reference_forward(state, action, params)
    assert q.shape == (B, 1)
    assert jnp.allclose(q, q_ref, atol=1e-4, rtol=1e-3), "multi-tile mismatch vs reference"

    # Single-tile, no-padding path.
    q1 = jax.block_until_ready(
        critic_forward(state[:128], action[:128], packed, b_tile=128))
    q1_ref = reference_forward(state[:128], action[:128], params)
    assert q1.shape == (128, 1)
    assert jnp.allclose(q1, q1_ref, atol=1e-4, rtol=1e-3), "single-tile mismatch vs reference"

    print("KERNEL_OK")
</pallas_src>

<mosaic_0001>
module attributes {stable_mosaic.version = 11 : i64} {
  func.func @critic_kernel(%arg0: i32, %arg1: i32, %arg2: memref<128x16xf32, #tpu.memory_space<vmem>>, %arg3: memref<128x4xf32, #tpu.memory_space<vmem>>, %arg4: memref<64x16xf32, #tpu.memory_space<vmem>>, %arg5: memref<64x64xf32, #tpu.memory_space<vmem>>, %arg6: memref<64x4xf32, #tpu.memory_space<vmem>>, %arg7: memref<64x8xf32, #tpu.memory_space<vmem>>, %arg8: memref<1x128xf32, #tpu.memory_space<vmem>>, %arg9: memref<64x1xf32, #tpu.memory_space<vmem>>, %arg10: memref<64x1xf32, #tpu.memory_space<vmem>>, %arg11: memref<64x1xf32, #tpu.memory_space<vmem>>, %arg12: memref<64x1xf32, #tpu.memory_space<vmem>>) attributes {dimension_semantics = [#tpu.dimension_semantics<arbitrary>, #tpu.dimension_semantics<arbitrary>], iteration_bounds = array<i64: 2, 2>, scalar_prefetch = 0 : i64, scratch_operands = 4 : i64, tpu.core_type = #tpu.core_type<tc>, window_params = [{transform_indices = @transform_0, window_bounds = array<i64: 128, 16>}, {transform_indices = @transform_1, window_bounds = array<i64: 128, 4>}, {pipeline_mode = #tpu.pipeline_mode<synchronous>, transform_indices = @transform_2, window_bounds = array<i64: 64, 16>}, {pipeline_mode = #tpu.pipeline_mode<synchronous>, transform_indices = @transform_3, window_bounds = array<i64: 64, 64>}, {pipeline_mode = #tpu.pipeline_mode<synchronous>, transform_indices = @transform_4, window_bounds = array<i64: 64, 4>}, {pipeline_mode = #tpu.pipeline_mode<synchronous>, transform_indices = @transform_5, window_bounds = array<i64: 64, 8>}, {transform_indices = @transform_6, window_bounds = array<i64: 1, 128>}]} {
    %c0 = arith.constant 0 : index
    %c0_0 = arith.constant 0 : index
    %0 = vector.load %arg7[%c0, %c0_0] : memref<64x8xf32, #tpu.memory_space<vmem>>, vector<64x1xf32>
    %c0_i32 = arith.constant 0 : i32
    %1 = arith.cmpi eq, %arg0, %c0_i32 : i32
    %2 = arith.extui %1 : i1 to i32
    %c0_i32_1 = arith.constant 0 : i32
    %3 = arith.cmpi ne, %2, %c0_i32_1 : i32
    scf.if %3 {
      %c0_i32_3 = arith.constant 0 : i32
      %7 = arith.cmpi eq, %arg1, %c0_i32_3 : i32
      %8 = arith.extui %7 : i1 to i32
      %c0_i32_4 = arith.constant 0 : i32
      %9 = arith.cmpi ne, %8, %c0_i32_4 : i32
      scf.if %9 {
        %cst_20 = arith.constant 0.000000e+00 : f32
        %36 = vector.broadcast %cst_20 : f32 to vector<64x1xf32>
        %c0_21 = arith.constant 0 : index
        %c0_22 = arith.constant 0 : index
        %37 = vector.load %arg9[%c0_21, %c0_22] : memref<64x1xf32, #tpu.memory_space<vmem>>, vector<64x1xf32>
        tpu.vector_store %arg9[%c0_21, %c0_22], %36 {strides = array<i32>} : memref<64x1xf32, #tpu.memory_space<vmem>>, vector<64x1xf32>,
        %cst_23 = arith.constant 0.000000e+00 : f32
        %38 = vector.broadcast %cst_23 : f32 to vector<64x1xf32>
        %c0_24 = arith.constant 0 : index
        %c0_25 = arith.constant 0 : index
        %39 = vector.load %arg10[%c0_24, %c0_25] : memref<64x1xf32, #tpu.memory_space<vmem>>, vector<64x1xf32>
        tpu.vector_store %arg10[%c0_24, %c0_25], %38 {strides = array<i32>} : memref<64x1xf32, #tpu.memory_space<vmem>>, vector<64x1xf32>,
      } else {
      }
      %c0_5 = arith.constant 0 : index
      %c0_6 = arith.constant 0 : index
      %10 = vector.load %arg4[%c0_5, %c0_6] : memref<64x16xf32, #tpu.memory_space<vmem>>, vector<64x16xf32>
      %c0_7 = arith.constant 0 : index
      %c0_8 = arith.constant 0 : index
      %11 = vector.load %arg2[%c0_7, %c0_8] : memref<128x16xf32, #tpu.memory_space<vmem>>, vector<128x16xf32>
      %cst = arith.constant dense<0.000000e+00> : vector<64x128xf32>
      %12 = tpu.matmul %10, %11, %cst {dimension_numbers = #tpu.dot_dimension_numbers<[1], [1], [0], [0], [0, 0, 1, 0], [], []>} : vector<64x16xf32>, vector<128x16xf32>, vector<64x128xf32> -> vector<64x128xf32>
      %13 = vector.broadcast %0 : vector<64x1xf32> to vector<64x128xf32>
      %14 = arith.addf %12, %13 : vector<64x128xf32>
      %15 = tpu.iota {dimensions = array<i32: 1>} : vector<1x128xi32>
      %c128_i32 = arith.constant 128 : i32
      %16 = arith.muli %arg1, %c128_i32 : i32
      %17 = vector.broadcast %16 : i32 to vector<1x128xi32>
      %18 = arith.addi %15, %17 : vector<1x128xi32>
      %c200_i32 = arith.constant 200 : i32
      %19 = vector.broadcast %c200_i32 : i32 to vector<1x128xi32>
      %20 = arith.cmpi slt, %18, %19 : vector<1x128xi32>
      %cst_9 = arith.constant 0.000000e+00 : f32
      %21 = vector.shape_cast %20 : vector<1x128xi1> to vector<1x128xi1>
      %22 = vector.broadcast %21 : vector<1x128xi1> to vector<64x128xi1>
      %23 = vector.broadcast %cst_9 : f32 to vector<64x128xf32>
      %24 = arith.select %22, %14, %23 : vector<64x128xi1>, vector<64x128xf32>
      %c0_10 = arith.constant 0 : index
      %c0_11 = arith.constant 0 : index
      %25 = vector.load %arg9[%c0_10, %c0_11] : memref<64x1xf32, #tpu.memory_space<vmem>>, vector<64x1xf32>
      %cst_12 = arith.constant dense<0.000000e+00> : vector<64xf32>
      %26 = vector.multi_reduction <add>, %24, %cst_12 [1] : vector<64x128xf32> to vector<64xf32>
      %27 = vector.shape_cast %26 : vector<64xf32> to vector<64x1xf32>
      %28 = arith.addf %25, %27 : vector<64x1xf32>
      %c0_13 = arith.constant 0 : index
      %c0_14 = arith.constant 0 : index
      %29 = vector.load %arg9[%c0_13, %c0_14] : memref<64x1xf32, #tpu.memory_space<vmem>>, vector<64x1xf32>
      tpu.vector_store %arg9[%c0_13, %c0_14], %28 {strides = array<i32>} : memref<64x1xf32, #tpu.memory_space<vmem>>, vector<64x1xf32>,
      %c0_15 = arith.constant 0 : index
      %c0_16 = arith.constant 0 : index
      %30 = vector.load %arg10[%c0_15, %c0_16] : memref<64x1xf32, #tpu.memory_space<vmem>>, vector<64x1xf32>
      %31 = arith.mulf %24, %24 : vector<64x128xf32>
      %cst_17 = arith.constant dense<0.000000e+00> : vector<64xf32>
      %32 = vector.multi_reduction <add>, %31, %cst_17 [1] : vector<64x128xf32> to vector<64xf32>
      %33 = vector.shape_cast %32 : vector<64xf32> to vector<64x1xf32>
      %34 = arith.addf %30, %33 : vector<64x1xf32>
      %c0_18 = arith.constant 0 : index
      %c0_19 = arith.constant 0 : index
      %35 = vector.load %arg10[%c0_18, %c0_19] : memref<64x1xf32, #tpu.memory_space<vmem>>, vector<64x1xf32>
      tpu.vector_store %arg10[%c0_18, %c0_19], %34 {strides = array<i32>} : memref<64x1xf32, #tpu.memory_space<vmem>>, vector<64x1xf32>,
    } else {
    }
    %c1_i32 = arith.constant 1 : i32
    %4 = arith.cmpi eq, %arg0, %c1_i32 : i32
    %5 = arith.extui %4 : i1 to i32
    %c0_i32_2 = arith.constant 0 : i32
    %6 = arith.cmpi ne, %5, %c0_i32_2 : i32
    scf.if %6 {
      %c0_i32_3 = arith.constant 0 : i32
      %7 = arith.cmpi eq, %arg1, %c0_i32_3 : i32
      %8 = arith.extui %7 : i1 to i32
      %c0_i32_4 = arith.constant 0 : i32
      %9 = arith.cmpi ne, %8, %c0_i32_4 : i32
      scf.if %9 {
        %c0_29 = arith.constant 0 : index
        %c0_30 = arith.constant 0 : index
        %45 = vector.load %arg9[%c0_29, %c0_30] : memref<64x1xf32, #tpu.memory_space<vmem>>, vector<64x1xf32>
        %cst_31 = arith.constant 5.000000e-03 : f32
        %46 = vector.broadcast %cst_31 : f32 to vector<64x1xf32>
        %47 = arith.mulf %45, %46 : vector<64x1xf32>
        %c0_32 = arith.constant 0 : index
        %c0_33 = arith.constant 0 : index
        %48 = vector.load %arg10[%c0_32, %c0_33] : memref<64x1xf32, #tpu.memory_space<vmem>>, vector<64x1xf32>
        %cst_34 = arith.constant 5.000000e-03 : f32
        %49 = vector.broadcast %cst_34 : f32 to vector<64x1xf32>
        %50 = arith.mulf %48, %49 : vector<64x1xf32>
        %51 = arith.mulf %47, %47 : vector<64x1xf32>
        %52 = arith.subf %50, %51 : vector<64x1xf32>
        %cst_35 = arith.constant 0.000000e+00 : f32
        %53 = vector.broadcast %cst_35 : f32 to vector<64x1xf32>
        %54 = arith.maximumf %52, %53 : vector<64x1xf32>
        %c0_36 = arith.constant 0 : index
        %c1 = arith.constant 1 : index
        %55 = vector.load %arg7[%c0_36, %c1] : memref<64x8xf32, #tpu.memory_space<vmem>>, vector<64x1xf32>
        %c0_37 = arith.constant 0 : index
        %c2 = arith.constant 2 : index
        %56 = vector.load %arg7[%c0_37, %c2] : memref<64x8xf32, #tpu.memory_space<vmem>>, vector<64x1xf32>
        %cst_38 = arith.constant 9.99999974E-6 : f32
        %57 = vector.broadcast %cst_38 : f32 to vector<64x1xf32>
        %58 = arith.addf %54, %57 : vector<64x1xf32>
        %59 = math.rsqrt %58 : vector<64x1xf32>
        %60 = arith.mulf %55, %59 : vector<64x1xf32>
        %c0_39 = arith.constant 0 : index
        %c0_40 = arith.constant 0 : index
        %61 = vector.load %arg11[%c0_39, %c0_40] : memref<64x1xf32, #tpu.memory_space<vmem>>, vector<64x1xf32>
        tpu.vector_store %arg11[%c0_39, %c0_40], %60 {strides = array<i32>} : memref<64x1xf32, #tpu.memory_space<vmem>>, vector<64x1xf32>,
        %62 = arith.mulf %47, %60 : vector<64x1xf32>
        %63 = arith.subf %56, %62 : vector<64x1xf32>
        %c0_41 = arith.constant 0 : index
        %c0_42 = arith.constant 0 : index
        %64 = vector.load %arg12[%c0_41, %c0_42] : memref<64x1xf32, #tpu.memory_space<vmem>>, vector<64x1xf32>
        tpu.vector_store %arg12[%c0_41, %c0_42], %63 {strides = array<i32>} : memref<64x1xf32, #tpu.memory_space<vmem>>, vector<64x1xf32>,
      } else {
      }
      %c0_5 = arith.constant 0 : index
      %c0_6 = arith.constant 0 : index
      %10 = vector.load %arg4[%c0_5, %c0_6] : memref<64x16xf32, #tpu.memory_space<vmem>>, vector<64x16xf32>
      %c0_7 = arith.constant 0 : index
      %c0_8 = arith.constant 0 : index
      %11 = vector.load %arg2[%c0_7, %c0_8] : memref<128x16xf32, #tpu.memory_space<vmem>>, vector<128x16xf32>
      %cst = arith.constant dense<0.000000e+00> : vector<64x128xf32>
      %12 = tpu.matmul %10, %11, %cst {dimension_numbers = #tpu.dot_dimension_numbers<[1], [1], [0], [0], [0, 0, 1, 0], [], []>} : vector<64x16xf32>, vector<128x16xf32>, vector<64x128xf32> -> vector<64x128xf32>
      %13 = vector.broadcast %0 : vector<64x1xf32> to vector<64x128xf32>
      %14 = arith.addf %12, %13 : vector<64x128xf32>
      %c0_9 = arith.constant 0 : index
      %c0_10 = arith.constant 0 : index
      %15 = vector.load %arg11[%c0_9, %c0_10] : memref<64x1xf32, #tpu.memory_space<vmem>>, vector<64x1xf32>
      %16 = vector.broadcast %15 : vector<64x1xf32> to vector<64x128xf32>
      %17 = arith.mulf %14, %16 : vector<64x128xf32>
      %c0_11 = arith.constant 0 : index
      %c0_12 = arith.constant 0 : index
      %18 = vector.load %arg12[%c0_11, %c0_12] : memref<64x1xf32, #tpu.memory_space<vmem>>, vector<64x1xf32>
      %19 = vector.broadcast %18 : vector<64x1xf32> to vector<64x128xf32>
      %20 = arith.addf %17, %19 : vector<64x128xf32>
      %cst_13 = arith.constant 0.00999999977 : f32
      %21 = vector.broadcast %cst_13 : f32 to vector<64x128xf32>
      %22 = arith.mulf %21, %20 : vector<64x128xf32>
      %23 = arith.maximumf %20, %22 : vector<64x128xf32>
      %c0_14 = arith.constant 0 : index
      %c3 = arith.constant 3 : index
      %24 = vector.load %arg7[%c0_14, %c3] : memref<64x8xf32, #tpu.memory_space<vmem>>, vector<64x1xf32>
      %c0_15 = arith.constant 0 : index
      %c0_16 = arith.constant 0 : index
      %25 = vector.load %arg5[%c0_15, %c0_16] : memref<64x64xf32, #tpu.memory_space<vmem>>, vector<64x64xf32>
      %cst_17 = arith.constant dense<0.000000e+00> : vector<64x128xf32>
      %26 = tpu.matmul %25, %23, %cst_17 {dimension_numbers = #tpu.dot_dimension_numbers<[1], [0], [0], [1], [0, 0, 1, 1], [], []>} : vector<64x64xf32>, vector<64x128xf32>, vector<64x128xf32> -> vector<64x128xf32>
      %c0_18 = arith.constant 0 : index
      %c0_19 = arith.constant 0 : index
      %27 = vector.load %arg6[%c0_18, %c0_19] : memref<64x4xf32, #tpu.memory_space<vmem>>, vector<64x4xf32>
      %c0_20 = arith.constant 0 : index
      %c0_21 = arith.constant 0 : index
      %28 = vector.load %arg3[%c0_20, %c0_21] : memref<128x4xf32, #tpu.memory_space<vmem>>, vector<128x4xf32>
      %cst_22 = arith.constant dense<0.000000e+00> : vector<64x128xf32>
      %29 = tpu.matmul %27, %28, %cst_22 {dimension_numbers = #tpu.dot_dimension_numbers<[1], [1], [0], [0], [0, 0, 1, 0], [], []>} : vector<64x4xf32>, vector<128x4xf32>, vector<64x128xf32> -> vector<64x128xf32>
      %30 = arith.addf %26, %29 : vector<64x128xf32>
      %31 = vector.broadcast %24 : vector<64x1xf32> to vector<64x128xf32>
      %32 = arith.addf %30, %31 : vector<64x128xf32>
      %cst_23 = arith.constant 0.00999999977 : f32
      %33 = vector.broadcast %cst_23 : f32 to vector<64x128xf32>
      %34 = arith.mulf %33, %32 : vector<64x128xf32>
      %35 = arith.maximumf %32, %34 : vector<64x128xf32>
      %c0_24 = arith.constant 0 : index
      %c4 = arith.constant 4 : index
      %36 = vector.load %arg7[%c0_24, %c4] : memref<64x8xf32, #tpu.memory_space<vmem>>, vector<64x1xf32>
      %c0_25 = arith.constant 0 : index
      %c5 = arith.constant 5 : index
      %37 = vector.load %arg7[%c0_25, %c5] : memref<64x8xf32, #tpu.memory_space<vmem>>, vector<1x1xf32>
      %38 = vector.broadcast %36 : vector<64x1xf32> to vector<64x128xf32>
      %39 = arith.mulf %35, %38 : vector<64x128xf32>
      %cst_26 = arith.constant dense<0.000000e+00> : vector<128xf32>
      %40 = vector.multi_reduction <add>, %39, %cst_26 [0] : vector<64x128xf32> to vector<128xf32>
      %41 = vector.shape_cast %40 : vector<128xf32> to vector<1x128xf32>
      %42 = vector.broadcast %37 : vector<1x1xf32> to vector<1x128xf32>
      %43 = arith.addf %41, %42 : vector<1x128xf32>
      %c0_27 = arith.constant 0 : index
      %c0_28 = arith.constant 0 : index
      %44 = vector.load %arg8[%c0_27, %c0_28] : memref<1x128xf32, #tpu.memory_space<vmem>>, vector<1x128xf32>
      tpu.vector_store %arg8[%c0_27, %c0_28], %43 {strides = array<i32>} : memref<1x128xf32, #tpu.memory_space<vmem>>, vector<1x128xf32>,
    } else {
    }
    return
  }
  func.func @transform_0(%arg0: i32, %arg1: i32) -> (i32, i32) {
    %c0_i32 = arith.constant 0 : i32
    %c0_i32_0 = arith.constant 0 : i32
    return %arg1, %c0_i32 : i32, i32
  }
  func.func @transform_1(%arg0: i32, %arg1: i32) -> (i32, i32) {
    %0 = arith.muli %arg1, %arg0 : i32
    %c0_i32 = arith.constant 0 : i32
    %c0_i32_0 = arith.constant 0 : i32
    return %0, %c0_i32 : i32, i32
  }
  func.func @transform_2(%arg0: i32, %arg1: i32) -> (i32, i32) {
    %c0_i32 = arith.constant 0 : i32
    %c0_i32_0 = arith.constant 0 : i32
    %c0_i32_1 = arith.constant 0 : i32
    return %c0_i32, %c0_i32_0 : i32, i32
  }
  func.func @transform_3(%arg0: i32, %arg1: i32) -> (i32, i32) {
    %c0_i32 = arith.constant 0 : i32
    %c0_i32_0 = arith.constant 0 : i32
    %c0_i32_1 = arith.constant 0 : i32
    return %c0_i32, %c0_i32_0 : i32, i32
  }
  func.func @transform_4(%arg0: i32, %arg1: i32) -> (i32, i32) {
    %c0_i32 = arith.constant 0 : i32
    %c0_i32_0 = arith.constant 0 : i32
    %c0_i32_1 = arith.constant 0 : i32
    return %c0_i32, %c0_i32_0 : i32, i32
  }
  func.func @transform_5(%arg0: i32, %arg1: i32) -> (i32, i32) {
    %c0_i32 = arith.constant 0 : i32
    %c0_i32_0 = arith.constant 0 : i32
    %c0_i32_1 = arith.constant 0 : i32
    return %c0_i32, %c0_i32_0 : i32, i32
  }
  func.func @transform_6(%arg0: i32, %arg1: i32) -> (i32, i32) {
    %0 = arith.muli %arg1, %arg0 : i32
    %c0_i32 = arith.constant 0 : i32
    %c0_i32_0 = arith.constant 0 : i32
    return %c0_i32, %0 : i32, i32
  }
}

</mosaic_0001>

<llo_original>
// kernel: tpu_custom_call.1
$region0: #{tpu_custom_call.1}
  #allocation0 [shape = 'u32[]', space=smem, size = 0x4, offset = 0x4, fixed_abs, tag = 'smem constant byte address 0x4 - core index']
  #allocation1 [shape = 'u32[144,128]{1,0:T(1,128)}', space=vmem, size = 0x12000, scoped, tag = 'internal scratch']
  #allocation2 [shape = 'f32[64,1]{1,0:T(8,128)}', space=vmem, size = 0x8000, scoped, tag = 'scratch operand']
  #allocation3 [shape = 'f32[64,1]{1,0:T(8,128)}', space=vmem, size = 0x8000, scoped, tag = 'scratch operand']
  #allocation4 [shape = 'f32[64,1]{1,0:T(8,128)}', space=vmem, size = 0x8000, scoped, tag = 'scratch operand']
  #allocation5 [shape = 'f32[64,1]{1,0:T(8,128)}', space=vmem, size = 0x8000, scoped, tag = 'scratch operand']
  %s0 = inlined_call_operand.vmem [shape: f32[256,16], index: 0, kind: input, shape index: {}]
  %s1 = inlined_call_operand.vmem [shape: f32[256,4], index: 1, kind: input, shape index: {}]
  %s2 = inlined_call_operand.vmem [shape: f32[64,16], index: 2, kind: input, shape index: {}]
  %s3 = inlined_call_operand.vmem [shape: f32[64,64], index: 3, kind: input, shape index: {}]
  %s4 = inlined_call_operand.vmem [shape: f32[64,4], index: 4, kind: input, shape index: {}]
  %s5 = inlined_call_operand.vmem [shape: f32[64,8], index: 5, kind: input, shape index: {}]
  %s6 = inlined_call_operand.hbm [shape: f32[1,256], index: 6, kind: output, shape index: {}]
  %s7 = sld [smem:[#allocation0]]
  $region73: #{tpu_custom_call.1} parent=0
    _
  %s9 = ssub.s32 1, %s7
  %s10 = scalar_select 0, %s9, %s7
  $region1: #{tpu_custom_call.1} parent=0
    #allocation6 [shape = 'u8[1024]{0}', space=vmem, size = 0x400, scoped, tag = 'output window, operand 0']
    #allocation7 [shape = 's32[2]{0}', space=sflag, size = 0x8, scoped, tag = 'scoped memory for tpu_custom_call.1']
    %11 = vsyncpa [#allocation7], 0
    %s12 = scalar_lea.sflag [#allocation7], 1
    %13 = vsyncpa %s12, 0
    loop: start=0, step=1, limit=6
    $region2: #{tpu_custom_call.1} parent=1 // loop_pre_header
      _
    $region3: #{tpu_custom_call.1} parent=1 // loop_header
      %s15 = sphi 0, %s19
      %p16 = scmp.ge.s32.totalorder %s15, 6
      %s22 = sphi 0, %s34
      %s23 = sphi 0, %s30
      %s24 = sphi 0, %s22
      %s25 = sphi 0, %s23
      %s26 = sphi 0, %s24
      %s27 = sphi 0, %s25
      %s37 = sphi 0, %s39
      %s40 = sphi 0, %s37
      %s41 = sphi 0, %s40
      %s57 = sphi 0, %s41
      %s65 = sphi 0, %s67
      %s68 = sphi 0, %s65
      %s69 = sphi 0, %s68
      %s85 = sphi 0, %s69
      %s89 = sphi 0, %s89
      %s91 = sphi 0, %s89
      %s92 = sphi 0, %s91
      %s106 = sphi 0, %s92
      %s110 = sphi 0, %s110
      %s112 = sphi 0, %s110
      %s113 = sphi 0, %s112
      %s127 = sphi 0, %s113
      %s131 = sphi 0, %s131
      %s133 = sphi 0, %s131
      %s134 = sphi 0, %s133
      %s148 = sphi 0, %s134
      %s152 = sphi 0, %s152
      %s154 = sphi 0, %s152
      %s155 = sphi 0, %s154
      %s169 = sphi 0, %s155
      %s177 = sphi 0, %s179
      %s180 = sphi 0, %s177
      %s181 = sphi 0, %s180
      %s197 = sphi 0, %s181
    $region4: #{tpu_custom_call.1} parent=1 // loop_header_branch
      %18 = sbr.rel (%p16) target = $region8
    $region5: #{tpu_custom_call.1} parent=1 // loop_body
      %s20 = ssub.s32 %s15, 1
      %s21 = ssub.s32 %s15, 2
      %s28 = sadd.s32 1, %s23
      %p29 = scmp.ge.s32.totalorder %s28, 2
      %s30 = scalar_select %p29, 0, %s28
      %s31 = sadd.s32 1, %s22
      %s32 = scalar_select %p29, %s31, %s22
      %p33 = scmp.ge.s32.totalorder %s32, 2
      %s34 = scalar_select %p33, 0, %s32
      %s35 = ssub.s32 %s23, %s30
      %p36 = scmp.eq.s32.totalorder %s35, 0
      %s38 = sadd.s32 %s37, 1
      %s39 = scalar_select %p36, %s37, %s38
      %p42 = pneg %p36
      %p43 = scmp.eq.s32.totalorder %s15, 3
      %p44 = por %p42, %p43
      %p45 = scmp.ne.s32.totalorder %s37, %s40
      %p46 = scmp.eq.s32.totalorder %s15, 0
      %p47 = por %p45, %p46
      %p48 = scmp.ne.s32.totalorder %s37, %s40
      %p49 = scmp.eq.s32.totalorder %s20, 3
      %p50 = por %p48, %p49
      %p51 = scmp.ne.s32.totalorder %s40, %s41
      %p52 = scmp.eq.s32.totalorder %s20, 0
      %p53 = por %p51, %p52
      %p54 = scmp.ne.s32.totalorder %s40, %s41
      %p55 = scmp.eq.s32.totalorder %s21, 3
      %p56 = por %p54, %p55
      %p58 = scmp.ne.s32.totalorder %s41, %s57
      %p59 = scmp.eq.s32.totalorder %s21, 0
      %p60 = por %p58, %p59
      %s61 = smul.u32 %s23, %s22
      %s62 = smul.u32 %s30, %s34
      %s63 = ssub.s32 %s61, %s62
      %p64 = scmp.eq.s32.totalorder %s63, 0
      %s66 = sadd.s32 %s65, 1
      %s67 = scalar_select %p64, %s65, %s66
      %p70 = pneg %p64
      %p71 = scmp.eq.s32.totalorder %s15, 3
      %p72 = por %p70, %p71
      %p73 = scmp.ne.s32.totalorder %s65, %s68
      %p74 = scmp.eq.s32.totalorder %s15, 0
      %p75 = por %p73, %p74
      %p76 = scmp.ne.s32.totalorder %s65, %s68
      %p77 = scmp.eq.s32.totalorder %s20, 3
      %p78 = por %p76, %p77
      %p79 = scmp.ne.s32.totalorder %s68, %s69
      %p80 = scmp.eq.s32.totalorder %s20, 0
      %p81 = por %p79, %p80
      %p82 = scmp.ne.s32.totalorder %s68, %s69
      %p83 = scmp.eq.s32.totalorder %s21, 3
      %p84 = por %p82, %p83
      %p86 = scmp.ne.s32.totalorder %s69, %s85
      %p87 = scmp.eq.s32.totalorder %s21, 0
      %p88 = por %p86, %p87
      %s90 = sadd.s32 %s89, 1
      %p93 = scmp.eq.s32.totalorder %s15, 3
      %p94 = scmp.ne.s32.totalorder %s89, %s91
      %p95 = scmp.eq.s32.totalorder %s15, 0
      %p96 = por %p94, %p95
      %p97 = scmp.ne.s32.totalorder %s89, %s91
      %p98 = scmp.eq.s32.totalorder %s20, 3
      %p99 = por %p97, %p98
      %p100 = scmp.ne.s32.totalorder %s91, %s92
      %p101 = scmp.eq.s32.totalorder %s20, 0
      %p102 = por %p100, %p101
      %p103 = scmp.ne.s32.totalorder %s91, %s92
      %p104 = scmp.eq.s32.totalorder %s21, 3
      %p105 = por %p103, %p104
      %p107 = scmp.ne.s32.totalorder %s92, %s106
      %p108 = scmp.eq.s32.totalorder %s21, 0
      %p109 = por %p107, %p108
      %s111 = sadd.s32 %s110, 1
      %p114 = scmp.eq.s32.totalorder %s15, 3
      %p115 = scmp.ne.s32.totalorder %s110, %s112
      %p116 = scmp.eq.s32.totalorder %s15, 0
      %p117 = por %p115, %p116
      %p118 = scmp.ne.s32.totalorder %s110, %s112
      %p119 = scmp.eq.s32.totalorder %s20, 3
      %p120 = por %p118, %p119
      %p121 = scmp.ne.s32.totalorder %s112, %s113
      %p122 = scmp.eq.s32.totalorder %s20, 0
      %p123 = por %p121, %p122
      %p124 = scmp.ne.s32.totalorder %s112, %s113
      %p125 = scmp.eq.s32.totalorder %s21, 3
      %p126 = por %p124, %p125
      %p128 = scmp.ne.s32.totalorder %s113, %s127
      %p129 = scmp.eq.s32.totalorder %s21, 0
      %p130 = por %p128, %p129
      %s132 = sadd.s32 %s131, 1
      %p135 = scmp.eq.s32.totalorder %s15, 3
      %p136 = scmp.ne.s32.totalorder %s131, %s133
      %p137 = scmp.eq.s32.totalorder %s15, 0
      %p138 = por %p136, %p137
      %p139 = scmp.ne.s32.totalorder %s131, %s133
      %p140 = scmp.eq.s32.totalorder %s20, 3
      %p141 = por %p139, %p140
      %p142 = scmp.ne.s32.totalorder %s133, %s134
      %p143 = scmp.eq.s32.totalorder %s20, 0
      %p144 = por %p142, %p143
      %p145 = scmp.ne.s32.totalorder %s133, %s134
      %p146 = scmp.eq.s32.totalorder %s21, 3
      %p147 = por %p145, %p146
      %p149 = scmp.ne.s32.totalorder %s134, %s148
      %p150 = scmp.eq.s32.totalorder %s21, 0
      %p151 = por %p149, %p150
      %s153 = sadd.s32 %s152, 1
      %p156 = scmp.eq.s32.totalorder %s15, 3
      %p157 = scmp.ne.s32.totalorder %s152, %s154
      %p158 = scmp.eq.s32.totalorder %s15, 0
      %p159 = por %p157, %p158
      %p160 = scmp.ne.s32.totalorder %s152, %s154
      %p161 = scmp.eq.s32.totalorder %s20, 3
      %p162 = por %p160, %p161
      %p163 = scmp.ne.s32.totalorder %s154, %s155
      %p164 = scmp.eq.s32.totalorder %s20, 0
      %p165 = por %p163, %p164
      %p166 = scmp.ne.s32.totalorder %s154, %s155
      %p167 = scmp.eq.s32.totalorder %s21, 3
      %p168 = por %p166, %p167
      %p170 = scmp.ne.s32.totalorder %s155, %s169
      %p171 = scmp.eq.s32.totalorder %s21, 0
      %p172 = por %p170, %p171
      %s173 = smul.u32 %s23, %s22
      %s174 = smul.u32 %s30, %s34
      %s175 = ssub.s32 %s173, %s174
      %p176 = scmp.eq.s32.totalorder %s175, 0
      %s178 = sadd.s32 %s177, 1
      %s179 = scalar_select %p176, %s177, %s178
      %p182 = pneg %p176
      %p183 = scmp.eq.s32.totalorder %s15, 3
      %p184 = por %p182, %p183
      %p185 = scmp.ne.s32.totalorder %s177, %s180
      %p186 = scmp.eq.s32.totalorder %s15, 0
      %p187 = por %p185, %p186
      %p188 = scmp.ne.s32.totalorder %s177, %s180
      %p189 = scmp.eq.s32.totalorder %s20, 3
      %p190 = por %p188, %p189
      %p191 = scmp.ne.s32.totalorder %s180, %s181
      %p192 = scmp.eq.s32.totalorder %s20, 0
      %p193 = por %p191, %p192
      %p194 = scmp.ne.s32.totalorder %s180, %s181
      %p195 = scmp.eq.s32.totalorder %s21, 3
      %p196 = por %p194, %p195
      %p198 = scmp.ne.s32.totalorder %s181, %s197
      %p199 = scmp.eq.s32.totalorder %s21, 0
      %p200 = por %p198, %p199
      %p201 = scmp.le.s32.totalorder 1, %s15
      %p202 = scmp.lt.s32.totalorder %s15, 5
      %p203 = pnand %p201, %p202
      %p204 = pneg %p203
      // Predicated region
      $region9: #{tpu_custom_call.1} parent=5 // pred_check
        _
      $region10: #{tpu_custom_call.1} parent=5 // pred_check_branch
        %206 = sbr.rel (%p203) target = $region12
      $region11: #{tpu_custom_call.1} parent=5 // pred_region
        %s207 = ssub.s32 %s15, 1
        // Predicated region
        $region13: #{tpu_custom_call.1} parent=11 // pred_check
          %p208 = pneg %p102
        $region14: #{tpu_custom_call.1} parent=11 // pred_check_branch
          %210 = sbr.rel (%p208) target = $region16
        $region15: #{tpu_custom_call.1} parent=11 // pred_region
          _
        $region16: #{tpu_custom_call.1} parent=11 // pred_fallthru
          _
        // Predicated region
        $region17: #{tpu_custom_call.1} parent=11 // pred_check
          %p211 = pneg %p123
        $region18: #{tpu_custom_call.1} parent=11 // pred_check_branch
          %213 = sbr.rel (%p211) target = $region20
        $region19: #{tpu_custom_call.1} parent=11 // pred_region
          _
        $region20: #{tpu_custom_call.1} parent=11 // pred_fallthru
          _
        // Predicated region
        $region21: #{tpu_custom_call.1} parent=11 // pred_check
          %p214 = pneg %p144
        $region22: #{tpu_custom_call.1} parent=11 // pred_check_branch
          %216 = sbr.rel (%p214) target = $region24
        $region23: #{tpu_custom_call.1} parent=11 // pred_region
          _
        $region24: #{tpu_custom_call.1} parent=11 // pred_fallthru
          _
        // Predicated region
        $region25: #{tpu_custom_call.1} parent=11 // pred_check
          %p217 = pneg %p165
        $region26: #{tpu_custom_call.1} parent=11 // pred_check_branch
          %219 = sbr.rel (%p217) target = $region28
        $region27: #{tpu_custom_call.1} parent=11 // pred_region
          _
        $region28: #{tpu_custom_call.1} parent=11 // pred_fallthru
          _
      $region12: #{tpu_custom_call.1} parent=5 // pred_fallthru
        _
      %p220 = scmp.lt.s32.totalorder %s15, 4
      // Predicated region
      $region29: #{tpu_custom_call.1} parent=5 // pred_check
        %p221 = pneg %p220
      $region30: #{tpu_custom_call.1} parent=5 // pred_check_branch
        %223 = sbr.rel (%p221) target = $region32
      $region31: #{tpu_custom_call.1} parent=5 // pred_region
        // Predicated region
        $region33: #{tpu_custom_call.1} parent=31 // pred_check
          %p224 = pneg %p47
        $region34: #{tpu_custom_call.1} parent=31 // pred_check_branch
          %226 = sbr.rel (%p224) target = $region36
        $region35: #{tpu_custom_call.1} parent=31 // pred_region
          %s227 = smul.u32 16, %s23
          %p228 = scmp.lt.s32.totalorder %s227, 31
          %s229 = scalar_select %p228, %s227, 31
          %s230 = smul.addr %s229, 8
          %s231 = scalar_lea.vmem %s0, %s230
          %s232 = smul.u32 16, %s23
        $region36: #{tpu_custom_call.1} parent=31 // pred_fallthru
          _
        // Predicated region
        $region37: #{tpu_custom_call.1} parent=31 // pred_check
          %p233 = pneg %p75
        $region38: #{tpu_custom_call.1} parent=31 // pred_check_branch
          %235 = sbr.rel (%p233) target = $region40
        $region39: #{tpu_custom_call.1} parent=31 // pred_region
          %s236 = smul.u32 %s23, %s22
          %s237 = smul.u32 16, %s236
          %p238 = scmp.lt.s32.totalorder %s237, 31
          %s239 = scalar_select %p238, %s237, 31
          %s240 = smul.addr %s239, 8
          %s241 = scalar_lea.vmem %s1, %s240
          %s242 = smul.u32 %s23, %s22
          %s243 = smul.u32 16, %s242
        $region40: #{tpu_custom_call.1} parent=31 // pred_fallthru
          _
      $region32: #{tpu_custom_call.1} parent=5 // pred_fallthru
        _
      %p244 = scmp.le.s32.totalorder 1, %s15
      %p245 = scmp.lt.s32.totalorder %s15, 5
      %p246 = pnand %p244, %p245
      %p247 = pneg %p246
      // Predicated region
      $region41: #{tpu_custom_call.1} parent=5 // pred_check
        _
      $region42: #{tpu_custom_call.1} parent=5 // pred_check_branch
        %249 = sbr.rel (%p246) target = $region44
      $region43: #{tpu_custom_call.1} parent=5 // pred_region
        %s250 = ssub.s32 %s15, 1
        %s251 = smul.u32 16, %s25
        %p252 = scmp.lt.s32.totalorder %s251, 31
        %s253 = scalar_select %p252, %s251, 31
        %s254 = smul.addr %s253, 8
        %s255 = scalar_lea.vmem %s0, %s254
        %p256 = pneg %p53
        %p257 = pneg %p50
        %s258 = smul.u32 %s25, %s24
        %s259 = smul.u32 16, %s258
        %p260 = scmp.lt.s32.totalorder %s259, 31
        %s261 = scalar_select %p260, %s259, 31
        %s262 = smul.addr %s261, 8
        %s263 = scalar_lea.vmem %s1, %s262
        %p264 = pneg %p81
        %p265 = pneg %p78
        %p266 = pneg %p102
        %p267 = pneg %p99
        %p268 = pneg %p123
        %p269 = pneg %p120
        %p270 = pneg %p144
        %p271 = pneg %p141
        %p272 = pneg %p165
        %p273 = pneg %p162
        %p274 = pneg %p193
        %p275 = pneg %p190
        %s276 = sand.u32 %s180, 1
        %s277 = scalar_lea.sflag [#allocation7], %s276
        %s278 = sand.u32 %s180, 1
        %s279 = scalar_lea.vmem [#allocation6], %s278
        %s280 = smul.u32 16, %s25
        %p281 = scmp.lt.s32.totalorder %s280, 31
        %s282 = scalar_select %p281, %s280, 31
        %s283 = smul.addr %s282, 8
        %s284 = scalar_lea.vmem %s0, %s283
        %s285 = smul.u32 16, %s25
        %s286 = smul.u32 %s25, %s24
        %s287 = smul.u32 16, %s286
        %p288 = scmp.lt.s32.totalorder %s287, 31
        %s289 = scalar_select %p288, %s287, 31
        %s290 = smul.addr %s289, 8
        %s291 = scalar_lea.vmem %s1, %s290
        %s292 = smul.u32 %s25, %s24
        %s293 = smul.u32 16, %s292
        %s294 = smul.u32 %s25, %s24
        %v295 = vld [vmem:[%s5] sm:$0xff]
        %v296 = vld [vmem:[%s5 + $0x8] sm:$0xff]
        %v297 = vld [vmem:[%s5 + $0x10] sm:$0xff]
        %v298 = vld [vmem:[%s5 + $0x18] sm:$0xff]
        %v299 = vld [vmem:[%s5 + $0x20] sm:$0xff]
        %v300 = vld [vmem:[%s5 + $0x28] sm:$0xff]
        %v301 = vld [vmem:[%s5 + $0x30] sm:$0xff]
        %v302 = vld [vmem:[%s5 + $0x38] sm:$0xff]
        %p303 = scmp.eq.s32.totalorder %s24, 0
        // Predicated region
        $region45: #{tpu_custom_call.1} parent=43 // pred_check
          %p304 = pneg %p303
        $region46: #{tpu_custom_call.1} parent=43 // pred_check_branch
          %306 = sbr.rel (%p304) target = $region48
        $region47: #{tpu_custom_call.1} parent=43 // pred_region
          %p307 = scmp.eq.s32.totalorder %s25, 0
          // Predicated region
          $region49: #{tpu_custom_call.1} parent=47 // pred_check
            %p308 = pneg %p307
          $region50: #{tpu_custom_call.1} parent=47 // pred_check_branch
            %310 = sbr.rel (%p308) target = $region52
          $region51: #{tpu_custom_call.1} parent=47 // pred_region
            %vm311 = vcmask 7168
            %312 = vst.msk [vmem:[#allocation2] sm:$0xff] %vm311, 0.0
            %313 = vst.msk [vmem:[#allocation2 + $0x8] sm:$0xff] %vm311, 0.0
            %314 = vst.msk [vmem:[#allocation2 + $0x10] sm:$0xff] %vm311, 0.0
            %315 = vst.msk [vmem:[#allocation2 + $0x18] sm:$0xff] %vm311, 0.0
            %316 = vst.msk [vmem:[#allocation2 + $0x20] sm:$0xff] %vm311, 0.0
            %317 = vst.msk [vmem:[#allocation2 + $0x28] sm:$0xff] %vm311, 0.0
            %318 = vst.msk [vmem:[#allocation2 + $0x30] sm:$0xff] %vm311, 0.0
            %319 = vst.msk [vmem:[#allocation2 + $0x38] sm:$0xff] %vm311, 0.0
            %320 = vst.msk [vmem:[#allocation3] sm:$0xff] %vm311, 0.0
            %321 = vst.msk [vmem:[#allocation3 + $0x8] sm:$0xff] %vm311, 0.0
            %322 = vst.msk [vmem:[#allocation3 + $0x10] sm:$0xff] %vm311, 0.0
            %323 = vst.msk [vmem:[#allocation3 + $0x18] sm:$0xff] %vm311, 0.0
            %324 = vst.msk [vmem:[#allocation3 + $0x20] sm:$0xff] %vm311, 0.0
            %325 = vst.msk [vmem:[#allocation3 + $0x28] sm:$0xff] %vm311, 0.0
            %326 = vst.msk [vmem:[#allocation3 + $0x30] sm:$0xff] %vm311, 0.0
            %327 = vst.msk [vmem:[#allocation3 + $0x38] sm:$0xff] %vm311, 0.0
          $region52: #{tpu_custom_call.1} parent=47 // pred_fallthru
            _
          %v328 = vld [vmem:[%s2] sm:$0xff]
          %v329 = vld [vmem:[%s2 + $0x8] sm:$0xff]
          %v330 = vld [vmem:[%s2 + $0x10] sm:$0xff]
          %v331 = vld [vmem:[%s2 + $0x18] sm:$0xff]
          %v332 = vld [vmem:[%s2 + $0x20] sm:$0xff]
          %v333 = vld [vmem:[%s2 + $0x28] sm:$0xff]
          %v334 = vld [vmem:[%s2 + $0x30] sm:$0xff]
          %v335 = vld [vmem:[%s2 + $0x38] sm:$0xff]
          %v336 = vld [vmem:[%s284] sm:$0xff]
          %v337 = vld [vmem:[%s284 + $0x8] sm:$0xff]
          %v338 = vld [vmem:[%s284 + $0x10] sm:$0xff]
          %v339 = vld [vmem:[%s284 + $0x18] sm:$0xff]
          %v340 = vld [vmem:[%s284 + $0x20] sm:$0xff]
          %v341 = vld [vmem:[%s284 + $0x28] sm:$0xff]
          %v342 = vld [vmem:[%s284 + $0x30] sm:$0xff]
          %v343 = vld [vmem:[%s284 + $0x38] sm:$0xff]
          %v344 = vld [vmem:[%s284 + $0x40] sm:$0xff]
          %v345 = vld [vmem:[%s284 + $0x48] sm:$0xff]
          %v346 = vld [vmem:[%s284 + $0x50] sm:$0xff]
          %v347 = vld [vmem:[%s284 + $0x58] sm:$0xff]
          %v348 = vld [vmem:[%s284 + $0x60] sm:$0xff]
          %v349 = vld [vmem:[%s284 + $0x68] sm:$0xff]
          %v350 = vld [vmem:[%s284 + $0x70] sm:$0xff]
          %v351 = vld [vmem:[%s284 + $0x78] sm:$0xff]
          %353 = vset.pattern.permute.xlu0 0
          %354 = vperm.xlu0 %353, %v295
          %v355 = vpop.permute.xlu0 %354
          %358 = vset.pattern.permute.xlu0 0
          %359 = vperm.xlu0 %358, %v296
          %v360 = vpop.permute.xlu0 %359
          %363 = vset.pattern.permute.xlu0 0
          %364 = vperm.xlu0 %363, %v297
          %v365 = vpop.permute.xlu0 %364
          %368 = vset.pattern.permute.xlu0 0
          %369 = vperm.xlu0 %368, %v298
          %v370 = vpop.permute.xlu0 %369
          %373 = vset.pattern.permute.xlu0 0
          %374 = vperm.xlu0 %373, %v299
          %v375 = vpop.permute.xlu0 %374
          %378 = vset.pattern.permute.xlu0 0
          %379 = vperm.xlu0 %378, %v300
          %v380 = vpop.permute.xlu0 %379
          %383 = vset.pattern.permute.xlu0 0
          %384 = vperm.xlu0 %383, %v301
          %v385 = vpop.permute.xlu0 %384
          %388 = vset.pattern.permute.xlu0 0
          %389 = vperm.xlu0 %388, %v302
          %v390 = vpop.permute.xlu0 %389
          %vm392 = vcmask 130048
          %v394 = vsel %vm392, %v328, 0
          %v397 = vsel %vm392, %v329, 0
          %v400 = vsel %vm392, %v330, 0
          %v403 = vsel %vm392, %v331, 0
          %v406 = vsel %vm392, %v332, 0
          %v409 = vsel %vm392, %v333, 0
          %v412 = vsel %vm392, %v334, 0
          %v415 = vsel %vm392, %v335, 0
          %v418 = vsel %vm392, %v336, 0
          %v421 = vsel %vm392, %v337, 0
          %v424 = vsel %vm392, %v338, 0
          %v427 = vsel %vm392, %v339, 0
          %v430 = vsel %vm392, %v340, 0
          %v433 = vsel %vm392, %v341, 0
          %v436 = vsel %vm392, %v342, 0
          %v439 = vsel %vm392, %v343, 0
          %v442 = vsel %vm392, %v344, 0
          %v445 = vsel %vm392, %v345, 0
          %v448 = vsel %vm392, %v346, 0
          %v451 = vsel %vm392, %v347, 0
          %v454 = vsel %vm392, %v348, 0
          %v457 = vsel %vm392, %v349, 0
          %v460 = vsel %vm392, %v350, 0
          %v463 = vsel %vm392, %v351, 0
          %465 = vmatprep.subr.mxu0 0.0
          %466 = vmatpush1.xpose.msra.mxu0 %v418
          %467 = vmatprep.subr.mxu0 0.0
          %468 = vmatpush1.xpose.msra.mxu0 %v421
          %469 = vmatprep.subr.mxu0 0.0
          %470 = vmatpush1.xpose.msra.mxu0 %v424
          %471 = vmatprep.subr.mxu0 0.0
          %472 = vmatpush1.xpose.msra.mxu0 %v427
          %473 = vmatprep.subr.mxu0 0.0
          %474 = vmatpush1.xpose.msra.mxu0 %v430
          %475 = vmatprep.subr.mxu0 0.0
          %476 = vmatpush1.xpose.msra.mxu0 %v433
          %477 = vmatprep.subr.mxu0 0.0
          %478 = vmatpush1.xpose.msra.mxu0 %v436
          %479 = vmatprep.subr.mxu0 0.0
          %480 = vmatpush1.xpose.msra.mxu0 %v439
          %481 = vmatprep.subr.mxu0 0.0
          %482 = vmatpush1.xpose.msra.mxu0 %v442
          %483 = vmatprep.subr.mxu0 0.0
          %484 = vmatpush1.xpose.msra.mxu0 %v445
          %485 = vmatprep.subr.mxu0 0.0
          %486 = vmatpush1.xpose.msra.mxu0 %v448
          %487 = vmatprep.subr.mxu0 0.0
          %488 = vmatpush1.xpose.msra.mxu0 %v451
          %489 = vmatprep.subr.mxu0 0.0
          %490 = vmatpush1.xpose.msra.mxu0 %v454
          %491 = vmatprep.subr.mxu0 0.0
          %492 = vmatpush1.xpose.msra.mxu0 %v457
          %493 = vmatprep.subr.mxu0 0.0
          %494 = vmatpush1.xpose.msra.mxu0 %v460
          %495 = vmatprep.subr.mxu0 0.0
          %496 = vmatpush1.xpose.msra.mxu0 %v463
          %497 = vmatprep.subr.mxu0 0.0
          %498 = vmatpush1.xpose.msra.mxu0 0.0
          %499 = vmatprep.subr.mxu0 0.0
          %500 = vmatpush1.xpose.msra.mxu0 0.0
          %501 = vmatprep.subr.mxu0 0.0
          %502 = vmatpush1.xpose.msra.mxu0 0.0
          %503 = vmatprep.subr.mxu0 0.0
          %504 = vmatpush1.xpose.msra.mxu0 0.0
          %505 = vmatprep.subr.mxu0 0.0
          %506 = vmatpush1.xpose.msra.mxu0 0.0
          %507 = vmatprep.subr.mxu0 0.0
          %508 = vmatpush1.xpose.msra.mxu0 0.0
          %509 = vmatprep.subr.mxu0 0.0
          %510 = vmatpush1.xpose.msra.mxu0 0.0
          %511 = vmatprep.subr.mxu0 0.0
          %512 = vmatpush1.xpose.msra.mxu0 0.0
          %513 = vmatprep.subr.mxu0 0.0
          %514 = vmatpush1.xpose.msra.mxu0 0.0
          %515 = vmatprep.subr.mxu0 0.0
          %516 = vmatpush1.xpose.msra.mxu0 0.0
          %517 = vmatprep.subr.mxu0 0.0
          %518 = vmatpush1.xpose.msra.mxu0 0.0
          %519 = vmatprep.subr.mxu0 0.0
          %520 = vmatpush1.xpose.msra.mxu0 0.0
          %521 = vmatprep.subr.mxu0 0.0
          %522 = vmatpush1.xpose.msra.mxu0 0.0
          %523 = vmatprep.subr.mxu0 0.0
          %524 = vmatpush1.xpose.msra.mxu0 0.0
          %525 = vmatprep.subr.mxu0 0.0
          %526 = vmatpush1.xpose.msra.mxu0 0.0
          %527 = vmatprep.subr.mxu0 0.0
          %528 = vmatpush1.xpose.msra.mxu0 0.0
          %529 = vmatprep.mubr.f32.mxu0 0.0
          %530 = vmatmul.mubr.f32.gmra.mrb[0].mxu0 %v394
          %v531 = vpop.f32.mrb[0].mxu0
          %v532 = vadd.f32 %v355, %v531
          %v533 = vpop.f32.mrb[0].mxu0
          %534 = vmatprep.mubr.f32.mxu0 0.0
          %535 = vmatmul.mubr.f32.gmra.mrb[0].mxu0 %v397
          %v536 = vpop.f32.mrb[0].mxu0
          %v537 = vadd.f32 %v360, %v536
          %v538 = vpop.f32.mrb[0].mxu0
          %539 = vmatprep.mubr.f32.mxu0 0.0
          %540 = vmatmul.mubr.f32.gmra.mrb[0].mxu0 %v400
          %v541 = vpop.f32.mrb[0].mxu0
          %v542 = vadd.f32 %v365, %v541
          %v543 = vpop.f32.mrb[0].mxu0
          %544 = vmatprep.mubr.f32.mxu0 0.0
          %545 = vmatmul.mubr.f32.gmra.mrb[0].mxu0 %v403
          %v546 = vpop.f32.mrb[0].mxu0
          %v547 = vadd.f32 %v370, %v546
          %v548 = vpop.f32.mrb[0].mxu0
          %549 = vmatprep.mubr.f32.mxu0 0.0
          %550 = vmatmul.mubr.f32.gmra.mrb[0].mxu0 %v406
          %v551 = vpop.f32.mrb[0].mxu0
          %v552 = vadd.f32 %v375, %v551
          %v553 = vpop.f32.mrb[0].mxu0
          %554 = vmatprep.mubr.f32.mxu0 0.0
          %555 = vmatmul.mubr.f32.gmra.mrb[0].mxu0 %v409
          %v556 = vpop.f32.mrb[0].mxu0
          %v557 = vadd.f32 %v380, %v556
          %v558 = vpop.f32.mrb[0].mxu0
          %559 = vmatprep.mubr.f32.mxu0 0.0
          %560 = vmatmul.mubr.f32.gmra.mrb[0].mxu0 %v412
          %v561 = vpop.f32.mrb[0].mxu0
          %v562 = vadd.f32 %v385, %v561
          %v563 = vpop.f32.mrb[0].mxu0
          %564 = vmatprep.mubr.f32.mxu0 0.0
          %565 = vmatmul.mubr.f32.gmra.mrb[0].mxu0 %v415
          %v566 = vpop.f32.mrb[0].mxu0
          %v567 = vadd.f32 %v390, %v566
          %v568 = vpop.f32.mrb[0].mxu0
          %569 = vdwg.mxu0
          %v570 = vlaneseq
          %v571 = vand.u32 %v570, 127
          %s572 = smul.u32 %s25, 128
          %v573 = vstv %s572
          %v574 = vadd.s32 %v571, %v573
          %vm575 = vcmp.lt.s32.totalorder %v574, 200
          %v576 = vsel %vm575, 1, 0
          %vm577 = vcmp.eq.s32.totalorder %v576, 1
          %v578 = vsel %vm577, %v532, 0.0
          %v579 = vsel %vm577, %v537, 0.0
          %v580 = vsel %vm577, %v542, 0.0
          %v581 = vsel %vm577, %v547, 0.0
          %v582 = vsel %vm577, %v552, 0.0
          %v583 = vsel %vm577, %v557, 0.0
          %v584 = vsel %vm577, %v562, 0.0
          %v585 = vsel %vm577, %v567, 0.0
          %v586 = vld [vmem:[#allocation2] sm:$0xff]
          %v587 = vld [vmem:[#allocation2 + $0x8] sm:$0xff]
          %v588 = vld [vmem:[#allocation2 + $0x10] sm:$0xff]
          %v589 = vld [vmem:[#allocation2 + $0x18] sm:$0xff]
          %v590 = vld [vmem:[#allocation2 + $0x20] sm:$0xff]
          %v591 = vld [vmem:[#allocation2 + $0x28] sm:$0xff]
          %v592 = vld [vmem:[#allocation2 + $0x30] sm:$0xff]
          %v593 = vld [vmem:[#allocation2 + $0x38] sm:$0xff]
          %594 = vadd.xlane.f32.xlu0 %v578
          %v595 = vpop.xlane.xlu0 %594
          %596 = vadd.xlane.f32.xlu0 %v579
          %v597 = vpop.xlane.xlu0 %596
          %598 = vadd.xlane.f32.xlu0 %v580
          %v599 = vpop.xlane.xlu0 %598
          %600 = vadd.xlane.f32.xlu0 %v581
          %v601 = vpop.xlane.xlu0 %600
          %602 = vadd.xlane.f32.xlu0 %v582
          %v603 = vpop.xlane.xlu0 %602
          %604 = vadd.xlane.f32.xlu0 %v583
          %v605 = vpop.xlane.xlu0 %604
          %606 = vadd.xlane.f32.xlu0 %v584
          %v607 = vpop.xlane.xlu0 %606
          %608 = vadd.xlane.f32.xlu0 %v585
          %v609 = vpop.xlane.xlu0 %608
          %v610 = vadd.f32 %v586, %v595
          %v611 = vadd.f32 %v587, %v597
          %v612 = vadd.f32 %v588, %v599
          %v613 = vadd.f32 %v589, %v601
          %v614 = vadd.f32 %v590, %v603
          %v615 = vadd.f32 %v591, %v605
          %v616 = vadd.f32 %v592, %v607
          %v617 = vadd.f32 %v593, %v609
          %vm618 = vcmask 7168
          %619 = vst.msk [vmem:[#allocation2] sm:$0xff] %vm618, %v610
          %620 = vst.msk [vmem:[#allocation2 + $0x8] sm:$0xff] %vm618, %v611
          %621 = vst.msk [vmem:[#allocation2 + $0x10] sm:$0xff] %vm618, %v612
          %622 = vst.msk [vmem:[#allocation2 + $0x18] sm:$0xff] %vm618, %v613
          %623 = vst.msk [vmem:[#allocation2 + $0x20] sm:$0xff] %vm618, %v614
          %624 = vst.msk [vmem:[#allocation2 + $0x28] sm:$0xff] %vm618, %v615
          %625 = vst.msk [vmem:[#allocation2 + $0x30] sm:$0xff] %vm618, %v616
          %626 = vst.msk [vmem:[#allocation2 + $0x38] sm:$0xff] %vm618, %v617
          %v627 = vld [vmem:[#allocation3] sm:$0xff]
          %v628 = vld [vmem:[#allocation3 + $0x8] sm:$0xff]
          %v629 = vld [vmem:[#allocation3 + $0x10] sm:$0xff]
          %v630 = vld [vmem:[#allocation3 + $0x18] sm:$0xff]
          %v631 = vld [vmem:[#allocation3 + $0x20] sm:$0xff]
          %v632 = vld [vmem:[#allocation3 + $0x28] sm:$0xff]
          %v633 = vld [vmem:[#allocation3 + $0x30] sm:$0xff]
          %v634 = vld [vmem:[#allocation3 + $0x38] sm:$0xff]
          %v635 = vmul.f32 %v578, %v578
          %v636 = vmul.f32 %v579, %v579
          %v637 = vmul.f32 %v580, %v580
          %v638 = vmul.f32 %v581, %v581
          %v639 = vmul.f32 %v582, %v582
          %v640 = vmul.f32 %v583, %v583
          %v641 = vmul.f32 %v584, %v584
          %v642 = vmul.f32 %v585, %v585
          %643 = vadd.xlane.f32.xlu0 %v635
          %v644 = vpop.xlane.xlu0 %643
          %645 = vadd.xlane.f32.xlu0 %v636
          %v646 = vpop.xlane.xlu0 %645
          %647 = vadd.xlane.f32.xlu0 %v637
          %v648 = vpop.xlane.xlu0 %647
          %649 = vadd.xlane.f32.xlu0 %v638
          %v650 = vpop.xlane.xlu0 %649
          %651 = vadd.xlane.f32.xlu0 %v639
          %v652 = vpop.xlane.xlu0 %651
          %653 = vadd.xlane.f32.xlu0 %v640
          %v654 = vpop.xlane.xlu0 %653
          %655 = vadd.xlane.f32.xlu0 %v641
          %v656 = vpop.xlane.xlu0 %655
          %657 = vadd.xlane.f32.xlu0 %v642
          %v658 = vpop.xlane.xlu0 %657
          %v659 = vadd.f32 %v627, %v644
          %v660 = vadd.f32 %v628, %v646
          %v661 = vadd.f32 %v629, %v648
          %v662 = vadd.f32 %v630, %v650
          %v663 = vadd.f32 %v631, %v652
          %v664 = vadd.f32 %v632, %v654
          %v665 = vadd.f32 %v633, %v656
          %v666 = vadd.f32 %v634, %v658
          %667 = vst.msk [vmem:[#allocation3] sm:$0xff] %vm618, %v659
          %668 = vst.msk [vmem:[#allocation3 + $0x8] sm:$0xff] %vm618, %v660
          %669 = vst.msk [vmem:[#allocation3 + $0x10] sm:$0xff] %vm618, %v661
          %670 = vst.msk [vmem:[#allocation3 + $0x18] sm:$0xff] %vm618, %v662
          %671 = vst.msk [vmem:[#allocation3 + $0x20] sm:$0xff] %vm618, %v663
          %672 = vst.msk [vmem:[#allocation3 + $0x28] sm:$0xff] %vm618, %v664
          %673 = vst.msk [vmem:[#allocation3 + $0x30] sm:$0xff] %vm618, %v665
          %674 = vst.msk [vmem:[#allocation3 + $0x38] sm:$0xff] %vm618, %v666
        $region48: #{tpu_custom_call.1} parent=43 // pred_fallthru
          _
        %p675 = scmp.eq.s32.totalorder %s24, 1
        // Predicated region
        $region53: #{tpu_custom_call.1} parent=43 // pred_check
          %p676 = pneg %p675
        $region54: #{tpu_custom_call.1} parent=43 // pred_check_branch
          %678 = sbr.rel (%p676) target = $region56
        $region55: #{tpu_custom_call.1} parent=43 // pred_region
          %p679 = scmp.eq.s32.totalorder %s25, 0
          // Predicated region
          $region57: #{tpu_custom_call.1} parent=55 // pred_check
            %p680 = pneg %p679
          $region58: #{tpu_custom_call.1} parent=55 // pred_check_branch
            %682 = sbr.rel (%p680) target = $region60
          $region59: #{tpu_custom_call.1} parent=55 // pred_region
            %v683 = vld [vmem:[#allocation2] sm:$0xff]
            %v684 = vld [vmem:[#allocation2 + $0x8] sm:$0xff]
            %v685 = vld [vmem:[#allocation2 + $0x10] sm:$0xff]
            %v686 = vld [vmem:[#allocation2 + $0x18] sm:$0xff]
            %v687 = vld [vmem:[#allocation2 + $0x20] sm:$0xff]
            %v688 = vld [vmem:[#allocation2 + $0x28] sm:$0xff]
            %v689 = vld [vmem:[#allocation2 + $0x30] sm:$0xff]
            %v690 = vld [vmem:[#allocation2 + $0x38] sm:$0xff]
            %v691 = vmul.f32 %v683, 0.005
            %v692 = vmul.f32 %v684, 0.005
            %v693 = vmul.f32 %v685, 0.005
            %v694 = vmul.f32 %v686, 0.005
            %v695 = vmul.f32 %v687, 0.005
            %v696 = vmul.f32 %v688, 0.005
            %v697 = vmul.f32 %v689, 0.005
            %v698 = vmul.f32 %v690, 0.005
            %v699 = vld [vmem:[#allocation3] sm:$0xff]
            %v700 = vld [vmem:[#allocation3 + $0x8] sm:$0xff]
            %v701 = vld [vmem:[#allocation3 + $0x10] sm:$0xff]
            %v702 = vld [vmem:[#allocation3 + $0x18] sm:$0xff]
            %v703 = vld [vmem:[#allocation3 + $0x20] sm:$0xff]
            %v704 = vld [vmem:[#allocation3 + $0x28] sm:$0xff]
            %v705 = vld [vmem:[#allocation3 + $0x30] sm:$0xff]
            %v706 = vld [vmem:[#allocation3 + $0x38] sm:$0xff]
            %v707 = vmul.f32 %v699, 0.005
            %v708 = vmul.f32 %v700, 0.005
            %v709 = vmul.f32 %v701, 0.005
            %v710 = vmul.f32 %v702, 0.005
            %v711 = vmul.f32 %v703, 0.005
            %v712 = vmul.f32 %v704, 0.005
            %v713 = vmul.f32 %v705, 0.005
            %v714 = vmul.f32 %v706, 0.005
            %v715 = vmul.f32 %v691, %v691
            %v716 = vmul.f32 %v692, %v692
            %v717 = vmul.f32 %v693, %v693
            %v718 = vmul.f32 %v694, %v694
            %v719 = vmul.f32 %v695, %v695
            %v720 = vmul.f32 %v696, %v696
            %v721 = vmul.f32 %v697, %v697
            %v722 = vmul.f32 %v698, %v698
            %v723 = vsub.f32 %v707, %v715
            %v724 = vsub.f32 %v708, %v716
            %v725 = vsub.f32 %v709, %v717
            %v726 = vsub.f32 %v710, %v718
            %v727 = vsub.f32 %v711, %v719
            %v728 = vsub.f32 %v712, %v720
            %v729 = vsub.f32 %v713, %v721
            %v730 = vsub.f32 %v714, %v722
            %v731 = vmax.f32 %v723, 0.0
            %v732 = vmax.f32 %v724, 0.0
            %v733 = vmax.f32 %v725, 0.0
            %v734 = vmax.f32 %v726, 0.0
            %v735 = vmax.f32 %v727, 0.0
            %v736 = vmax.f32 %v728, 0.0
            %v737 = vmax.f32 %v729, 0.0
            %v738 = vmax.f32 %v730, 0.0
            %v739 = vld [vmem:[%s5] sm:$0xff]
            %v740 = vld [vmem:[%s5 + $0x8] sm:$0xff]
            %v741 = vld [vmem:[%s5 + $0x10] sm:$0xff]
            %v742 = vld [vmem:[%s5 + $0x18] sm:$0xff]
            %v743 = vld [vmem:[%s5 + $0x20] sm:$0xff]
            %v744 = vld [vmem:[%s5 + $0x28] sm:$0xff]
            %v745 = vld [vmem:[%s5 + $0x30] sm:$0xff]
            %v746 = vld [vmem:[%s5 + $0x38] sm:$0xff]
            %v747 = vadd.f32 %v731, 1e-05
            %v748 = vadd.f32 %v732, 1e-05
            %v749 = vadd.f32 %v733, 1e-05
            %v750 = vadd.f32 %v734, 1e-05
            %v751 = vadd.f32 %v735, 1e-05
            %v752 = vadd.f32 %v736, 1e-05
            %v753 = vadd.f32 %v737, 1e-05
            %v754 = vadd.f32 %v738, 1e-05
            %v755 = vrsqrt.pop %v747
            %v756 = vrsqrt.pop %v748
            %v757 = vrsqrt.pop %v749
            %v758 = vrsqrt.pop %v750
            %v759 = vrsqrt.pop %v751
            %v760 = vrsqrt.pop %v752
            %v761 = vrsqrt.pop %v753
            %v762 = vrsqrt.pop %v754
            %771 = vrot.lane.b32.xlu0 %v755, 1
            %v772 = vpop.permute.xlu0 %771
            %773 = vrot.lane.b32.xlu0 %v756, 1
            %v774 = vpop.permute.xlu0 %773
            %775 = vrot.lane.b32.xlu0 %v757, 1
            %v776 = vpop.permute.xlu0 %775
            %777 = vrot.lane.b32.xlu0 %v758, 1
            %v778 = vpop.permute.xlu0 %777
            %779 = vrot.lane.b32.xlu0 %v759, 1
            %v780 = vpop.permute.xlu0 %779
            %781 = vrot.lane.b32.xlu0 %v760, 1
            %v782 = vpop.permute.xlu0 %781
            %783 = vrot.lane.b32.xlu0 %v761, 1
            %v784 = vpop.permute.xlu0 %783
            %785 = vrot.lane.b32.xlu0 %v762, 1
            %v786 = vpop.permute.xlu0 %785
            %v795 = vmul.f32 %v739, %v772
            %v796 = vmul.f32 %v740, %v774
            %v797 = vmul.f32 %v741, %v776
            %v798 = vmul.f32 %v742, %v778
            %v799 = vmul.f32 %v743, %v780
            %v800 = vmul.f32 %v744, %v782
            %v801 = vmul.f32 %v745, %v784
            %v802 = vmul.f32 %v746, %v786
            %811 = vrot.lane.b32.xlu0 %v795, 127
            %v812 = vpop.permute.xlu0 %811
            %813 = vrot.lane.b32.xlu0 %v796, 127
            %v814 = vpop.permute.xlu0 %813
            %815 = vrot.lane.b32.xlu0 %v797, 127
            %v816 = vpop.permute.xlu0 %815
            %817 = vrot.lane.b32.xlu0 %v798, 127
            %v818 = vpop.permute.xlu0 %817
            %819 = vrot.lane.b32.xlu0 %v799, 127
            %v820 = vpop.permute.xlu0 %819
            %821 = vrot.lane.b32.xlu0 %v800, 127
            %v822 = vpop.permute.xlu0 %821
            %823 = vrot.lane.b32.xlu0 %v801, 127
            %v824 = vpop.permute.xlu0 %823
            %825 = vrot.lane.b32.xlu0 %v802, 127
            %v826 = vpop.permute.xlu0 %825
            %vm835 = vcmask 7168
            %836 = vst.msk [vmem:[#allocation4] sm:$0xff] %vm835, %v812
            %837 = vst.msk [vmem:[#allocation4 + $0x8] sm:$0xff] %vm835, %v814
            %838 = vst.msk [vmem:[#allocation4 + $0x10] sm:$0xff] %vm835, %v816
            %839 = vst.msk [vmem:[#allocation4 + $0x18] sm:$0xff] %vm835, %v818
            %840 = vst.msk [vmem:[#allocation4 + $0x20] sm:$0xff] %vm835, %v820
            %841 = vst.msk [vmem:[#allocation4 + $0x28] sm:$0xff] %vm835, %v822
            %842 = vst.msk [vmem:[#allocation4 + $0x30] sm:$0xff] %vm835, %v824
            %843 = vst.msk [vmem:[#allocation4 + $0x38] sm:$0xff] %vm835, %v826
            %v844 = vmul.f32 %v691, %v812
            %v845 = vmul.f32 %v692, %v814
            %v846 = vmul.f32 %v693, %v816
            %v847 = vmul.f32 %v694, %v818
            %v848 = vmul.f32 %v695, %v820
            %v849 = vmul.f32 %v696, %v822
            %v850 = vmul.f32 %v697, %v824
            %v851 = vmul.f32 %v698, %v826
            %860 = vrot.lane.b32.xlu0 %v844, 2
            %v861 = vpop.permute.xlu0 %860
            %862 = vrot.lane.b32.xlu0 %v845, 2
            %v863 = vpop.permute.xlu0 %862
            %864 = vrot.lane.b32.xlu0 %v846, 2
            %v865 = vpop.permute.xlu0 %864
            %866 = vrot.lane.b32.xlu0 %v847, 2
            %v867 = vpop.permute.xlu0 %866
            %868 = vrot.lane.b32.xlu0 %v848, 2
            %v869 = vpop.permute.xlu0 %868
            %870 = vrot.lane.b32.xlu0 %v849, 2
            %v871 = vpop.permute.xlu0 %870
            %872 = vrot.lane.b32.xlu0 %v850, 2
            %v873 = vpop.permute.xlu0 %872
            %874 = vrot.lane.b32.xlu0 %v851, 2
            %v875 = vpop.permute.xlu0 %874
            %v884 = vsub.f32 %v739, %v861
            %v885 = vsub.f32 %v740, %v863
            %v886 = vsub.f32 %v741, %v865
            %v887 = vsub.f32 %v742, %v867
            %v888 = vsub.f32 %v743, %v869
            %v889 = vsub.f32 %v744, %v871
            %v890 = vsub.f32 %v745, %v873
            %v891 = vsub.f32 %v746, %v875
            %900 = vrot.lane.b32.xlu0 %v884, 126
            %v901 = vpop.permute.xlu0 %900
            %902 = vrot.lane.b32.xlu0 %v885, 126
            %v903 = vpop.permute.xlu0 %902
            %904 = vrot.lane.b32.xlu0 %v886, 126
            %v905 = vpop.permute.xlu0 %904
            %906 = vrot.lane.b32.xlu0 %v887, 126
            %v907 = vpop.permute.xlu0 %906
            %908 = vrot.lane.b32.xlu0 %v888, 126
            %v909 = vpop.permute.xlu0 %908
            %910 = vrot.lane.b32.xlu0 %v889, 126
            %v911 = vpop.permute.xlu0 %910
            %912 = vrot.lane.b32.xlu0 %v890, 126
            %v913 = vpop.permute.xlu0 %912
            %914 = vrot.lane.b32.xlu0 %v891, 126
            %v915 = vpop.permute.xlu0 %914
            %924 = vst.msk [vmem:[#allocation5] sm:$0xff] %vm835, %v901
            %925 = vst.msk [vmem:[#allocation5 + $0x8] sm:$0xff] %vm835, %v903
            %926 = vst.msk [vmem:[#allocation5 + $0x10] sm:$0xff] %vm835, %v905
            %927 = vst.msk [vmem:[#allocation5 + $0x18] sm:$0xff] %vm835, %v907
            %928 = vst.msk [vmem:[#allocation5 + $0x20] sm:$0xff] %vm835, %v909
            %929 = vst.msk [vmem:[#allocation5 + $0x28] sm:$0xff] %vm835, %v911
            %930 = vst.msk [vmem:[#allocation5 + $0x30] sm:$0xff] %vm835, %v913
            %931 = vst.msk [vmem:[#allocation5 + $0x38] sm:$0xff] %vm835, %v915
          $region60: #{tpu_custom_call.1} parent=55 // pred_fallthru
            _
          %v932 = vld [vmem:[%s2] sm:$0xff]
          %v933 = vld [vmem:[%s2 + $0x8] sm:$0xff]
          %v934 = vld [vmem:[%s2 + $0x10] sm:$0xff]
          %v935 = vld [vmem:[%s2 + $0x18] sm:$0xff]
          %v936 = vld [vmem:[%s2 + $0x20] sm:$0xff]
          %v937 = vld [vmem:[%s2 + $0x28] sm:$0xff]
          %v938 = vld [vmem:[%s2 + $0x30] sm:$0xff]
          %v939 = vld [vmem:[%s2 + $0x38] sm:$0xff]
          %v940 = vld [vmem:[%s284] sm:$0xff]
          %v941 = vld [vmem:[%s284 + $0x8] sm:$0xff]
          %v942 = vld [vmem:[%s284 + $0x10] sm:$0xff]
          %v943 = vld [vmem:[%s284 + $0x18] sm:$0xff]
          %v944 = vld [vmem:[%s284 + $0x20] sm:$0xff]
          %v945 = vld [vmem:[%s284 + $0x28] sm:$0xff]
          %v946 = vld [vmem:[%s284 + $0x30] sm:$0xff]
          %v947 = vld [vmem:[%s284 + $0x38] sm:$0xff]
          %v948 = vld [vmem:[%s284 + $0x40] sm:$0xff]
          %v949 = vld [vmem:[%s284 + $0x48] sm:$0xff]
          %v950 = vld [vmem:[%s284 + $0x50] sm:$0xff]
          %v951 = vld [vmem:[%s284 + $0x58] sm:$0xff]
          %v952 = vld [vmem:[%s284 + $0x60] sm:$0xff]
          %v953 = vld [vmem:[%s284 + $0x68] sm:$0xff]
          %v954 = vld [vmem:[%s284 + $0x70] sm:$0xff]
          %v955 = vld [vmem:[%s284 + $0x78] sm:$0xff]
          %957 = vset.pattern.permute.xlu0 0
          %958 = vperm.xlu0 %957, %v295
          %v959 = vpop.permute.xlu0 %958
          %962 = vset.pattern.permute.xlu0 0
          %963 = vperm.xlu0 %962, %v296
          %v964 = vpop.permute.xlu0 %963
          %967 = vset.pattern.permute.xlu0 0
          %968 = vperm.xlu0 %967, %v297
          %v969 = vpop.permute.xlu0 %968
          %972 = vset.pattern.permute.xlu0 0
          %973 = vperm.xlu0 %972, %v298
          %v974 = vpop.permute.xlu0 %973
          %977 = vset.pattern.permute.xlu0 0
          %978 = vperm.xlu0 %977, %v299
          %v979 = vpop.permute.xlu0 %978
          %982 = vset.pattern.permute.xlu0 0
          %983 = vperm.xlu0 %982, %v300
          %v984 = vpop.permute.xlu0 %983
          %987 = vset.pattern.permute.xlu0 0
          %988 = vperm.xlu0 %987, %v301
          %v989 = vpop.permute.xlu0 %988
          %992 = vset.pattern.permute.xlu0 0
          %993 = vperm.xlu0 %992, %v302
          %v994 = vpop.permute.xlu0 %993
          %vm996 = vcmask 130048
          %v998 = vsel %vm996, %v932, 0
          %v1001 = vsel %vm996, %v933, 0
          %v1004 = vsel %vm996, %v934, 0
          %v1007 = vsel %vm996, %v935, 0
          %v1010 = vsel %vm996, %v936, 0
          %v1013 = vsel %vm996, %v937, 0
          %v1016 = vsel %vm996, %v938, 0
          %v1019 = vsel %vm996, %v939, 0
          %v1022 = vsel %vm996, %v940, 0
          %v1025 = vsel %vm996, %v941, 0
          %v1028 = vsel %vm996, %v942, 0
          %v1031 = vsel %vm996, %v943, 0
          %v1034 = vsel %vm996, %v944, 0
          %v1037 = vsel %vm996, %v945, 0
          %v1040 = vsel %vm996, %v946, 0
          %v1043 = vsel %vm996, %v947, 0
          %v1046 = vsel %vm996, %v948, 0
          %v1049 = vsel %vm996, %v949, 0
          %v1052 = vsel %vm996, %v950, 0
          %v1055 = vsel %vm996, %v951, 0
          %v1058 = vsel %vm996, %v952, 0
          %v1061 = vsel %vm996, %v953, 0
          %v1064 = vsel %vm996, %v954, 0
          %v1067 = vsel %vm996, %v955, 0
          %1069 = vmatprep.subr.mxu0 0.0
          %1070 = vmatpush1.xpose.msra.mxu0 %v1022
          %1071 = vmatprep.subr.mxu0 0.0
          %1072 = vmatpush1.xpose.msra.mxu0 %v1025
          %1073 = vmatprep.subr.mxu0 0.0
          %1074 = vmatpush1.xpose.msra.mxu0 %v1028
          %1075 = vmatprep.subr.mxu0 0.0
          %1076 = vmatpush1.xpose.msra.mxu0 %v1031
          %1077 = vmatprep.subr.mxu0 0.0
          %1078 = vmatpush1.xpose.msra.mxu0 %v1034
          %1079 = vmatprep.subr.mxu0 0.0
          %1080 = vmatpush1.xpose.msra.mxu0 %v1037
          %1081 = vmatprep.subr.mxu0 0.0
          %1082 = vmatpush1.xpose.msra.mxu0 %v1040
          %1083 = vmatprep.subr.mxu0 0.0
          %1084 = vmatpush1.xpose.msra.mxu0 %v1043
          %1085 = vmatprep.subr.mxu0 0.0
          %1086 = vmatpush1.xpose.msra.mxu0 %v1046
          %1087 = vmatprep.subr.mxu0 0.0
          %1088 = vmatpush1.xpose.msra.mxu0 %v1049
          %1089 = vmatprep.subr.mxu0 0.0
          %1090 = vmatpush1.xpose.msra.mxu0 %v1052
          %1091 = vmatprep.subr.mxu0 0.0
          %1092 = vmatpush1.xpose.msra.mxu0 %v1055
          %1093 = vmatprep.subr.mxu0 0.0
          %1094 = vmatpush1.xpose.msra.mxu0 %v1058
          %1095 = vmatprep.subr.mxu0 0.0
          %1096 = vmatpush1.xpose.msra.mxu0 %v1061
          %1097 = vmatprep.subr.mxu0 0.0
          %1098 = vmatpush1.xpose.msra.mxu0 %v1064
          %1099 = vmatprep.subr.mxu0 0.0
          %1100 = vmatpush1.xpose.msra.mxu0 %v1067
          %1101 = vmatprep.subr.mxu0 0.0
          %1102 = vmatpush1.xpose.msra.mxu0 0.0
          %1103 = vmatprep.subr.mxu0 0.0
          %1104 = vmatpush1.xpose.msra.mxu0 0.0
          %1105 = vmatprep.subr.mxu0 0.0
          %1106 = vmatpush1.xpose.msra.mxu0 0.0
          %1107 = vmatprep.subr.mxu0 0.0
          %1108 = vmatpush1.xpose.msra.mxu0 0.0
          %1109 = vmatprep.subr.mxu0 0.0
          %1110 = vmatpush1.xpose.msra.mxu0 0.0
          %1111 = vmatprep.subr.mxu0 0.0
          %1112 = vmatpush1.xpose.msra.mxu0 0.0
          %1113 = vmatprep.subr.mxu0 0.0
          %1114 = vmatpush1.xpose.msra.mxu0 0.0
          %1115 = vmatprep.subr.mxu0 0.0
          %1116 = vmatpush1.xpose.msra.mxu0 0.0
          %1117 = vmatprep.subr.mxu0 0.0
          %1118 = vmatpush1.xpose.msra.mxu0 0.0
          %1119 = vmatprep.subr.mxu0 0.0
          %1120 = vmatpush1.xpose.msra.mxu0 0.0
          %1121 = vmatprep.subr.mxu0 0.0
          %1122 = vmatpush1.xpose.msra.mxu0 0.0
          %1123 = vmatprep.subr.mxu0 0.0
          %1124 = vmatpush1.xpose.msra.mxu0 0.0
          %1125 = vmatprep.subr.mxu0 0.0
          %1126 = vmatpush1.xpose.msra.mxu0 0.0
          %1127 = vmatprep.subr.mxu0 0.0
          %1128 = vmatpush1.xpose.msra.mxu0 0.0
          %1129 = vmatprep.subr.mxu0 0.0
          %1130 = vmatpush1.xpose.msra.mxu0 0.0
          %1131 = vmatprep.subr.mxu0 0.0
          %1132 = vmatpush1.xpose.msra.mxu0 0.0
          %1133 = vmatprep.mubr.f32.mxu0 0.0
          %1134 = vmatmul.mubr.f32.gmra.mrb[0].mxu0 %v998
          %v1135 = vpop.f32.mrb[0].mxu0
          %v1136 = vadd.f32 %v959, %v1135
          %v1137 = vpop.f32.mrb[0].mxu0
          %1138 = vmatprep.mubr.f32.mxu0 0.0
          %1139 = vmatmul.mubr.f32.gmra.mrb[0].mxu0 %v1001
          %v1140 = vpop.f32.mrb[0].mxu0
          %v1141 = vadd.f32 %v964, %v1140
          %v1142 = vpop.f32.mrb[0].mxu0
          %1143 = vmatprep.mubr.f32.mxu0 0.0
          %1144 = vmatmul.mubr.f32.gmra.mrb[0].mxu0 %v1004
          %v1145 = vpop.f32.mrb[0].mxu0
          %v1146 = vadd.f32 %v969, %v1145
          %v1147 = vpop.f32.mrb[0].mxu0
          %1148 = vmatprep.mubr.f32.mxu0 0.0
          %1149 = vmatmul.mubr.f32.gmra.mrb[0].mxu0 %v1007
          %v1150 = vpop.f32.mrb[0].mxu0
          %v1151 = vadd.f32 %v974, %v1150
          %v1152 = vpop.f32.mrb[0].mxu0
          %1153 = vmatprep.mubr.f32.mxu0 0.0
          %1154 = vmatmul.mubr.f32.gmra.mrb[0].mxu0 %v1010
          %v1155 = vpop.f32.mrb[0].mxu0
          %v1156 = vadd.f32 %v979, %v1155
          %v1157 = vpop.f32.mrb[0].mxu0
          %1158 = vmatprep.mubr.f32.mxu0 0.0
          %1159 = vmatmul.mubr.f32.gmra.mrb[0].mxu0 %v1013
          %v1160 = vpop.f32.mrb[0].mxu0
          %v1161 = vadd.f32 %v984, %v1160
          %v1162 = vpop.f32.mrb[0].mxu0
          %1163 = vmatprep.mubr.f32.mxu0 0.0
          %1164 = vmatmul.mubr.f32.gmra.mrb[0].mxu0 %v1016
          %v1165 = vpop.f32.mrb[0].mxu0
          %v1166 = vadd.f32 %v989, %v1165
          %v1167 = vpop.f32.mrb[0].mxu0
          %1168 = vmatprep.mubr.f32.mxu0 0.0
          %1169 = vmatmul.mubr.f32.gmra.mrb[0].mxu0 %v1019
          %v1170 = vpop.f32.mrb[0].mxu0
          %v1171 = vadd.f32 %v994, %v1170
          %v1172 = vpop.f32.mrb[0].mxu0
          %1173 = vdwg.mxu0
          %v1174 = vld [vmem:[#allocation4] sm:$0xff]
          %v1175 = vld [vmem:[#allocation4 + $0x8] sm:$0xff]
          %v1176 = vld [vmem:[#allocation4 + $0x10] sm:$0xff]
          %v1177 = vld [vmem:[#allocation4 + $0x18] sm:$0xff]
          %v1178 = vld [vmem:[#allocation4 + $0x20] sm:$0xff]
          %v1179 = vld [vmem:[#allocation4 + $0x28] sm:$0xff]
          %v1180 = vld [vmem:[#allocation4 + $0x30] sm:$0xff]
          %v1181 = vld [vmem:[#allocation4 + $0x38] sm:$0xff]
          %1183 = vset.pattern.permute.xlu0 0
          %1184 = vperm.xlu0 %1183, %v1174
          %v1185 = vpop.permute.xlu0 %1184
          %1188 = vset.pattern.permute.xlu0 0
          %1189 = vperm.xlu0 %1188, %v1175
          %v1190 = vpop.permute.xlu0 %1189
          %1193 = vset.pattern.permute.xlu0 0
          %1194 = vperm.xlu0 %1193, %v1176
          %v1195 = vpop.permute.xlu0 %1194
          %1198 = vset.pattern.permute.xlu0 0
          %1199 = vperm.xlu0 %1198, %v1177
          %v1200 = vpop.permute.xlu0 %1199
          %1203 = vset.pattern.permute.xlu0 0
          %1204 = vperm.xlu0 %1203, %v1178
          %v1205 = vpop.permute.xlu0 %1204
          %1208 = vset.pattern.permute.xlu0 0
          %1209 = vperm.xlu0 %1208, %v1179
          %v1210 = vpop.permute.xlu0 %1209
          %1213 = vset.pattern.permute.xlu0 0
          %1214 = vperm.xlu0 %1213, %v1180
          %v1215 = vpop.permute.xlu0 %1214
          %1218 = vset.pattern.permute.xlu0 0
          %1219 = vperm.xlu0 %1218, %v1181
          %v1220 = vpop.permute.xlu0 %1219
          %v1222 = vmul.f32 %v1136, %v1185
          %v1223 = vmul.f32 %v1141, %v1190
          %v1224 = vmul.f32 %v1146, %v1195
          %v1225 = vmul.f32 %v1151, %v1200
          %v1226 = vmul.f32 %v1156, %v1205
          %v1227 = vmul.f32 %v1161, %v1210
          %v1228 = vmul.f32 %v1166, %v1215
          %v1229 = vmul.f32 %v1171, %v1220
          %v1230 = vld [vmem:[#allocation5] sm:$0xff]
          %v1231 = vld [vmem:[#allocation5 + $0x8] sm:$0xff]
          %v1232 = vld [vmem:[#allocation5 + $0x10] sm:$0xff]
          %v1233 = vld [vmem:[#allocation5 + $0x18] sm:$0xff]
          %v1234 = vld [vmem:[#allocation5 + $0x20] sm:$0xff]
          %v1235 = vld [vmem:[#allocation5 + $0x28] sm:$0xff]
          %v1236 = vld [vmem:[#allocation5 + $0x30] sm:$0xff]
          %v1237 = vld [vmem:[#allocation5 + $0x38] sm:$0xff]
          %1239 = vset.pattern.permute.xlu0 0
          %1240 = vperm.xlu0 %1239, %v1230
          %v1241 = vpop.permute.xlu0 %1240
          %1244 = vset.pattern.permute.xlu0 0
          %1245 = vperm.xlu0 %1244, %v1231
          %v1246 = vpop.permute.xlu0 %1245
          %1249 = vset.pattern.permute.xlu0 0
          %1250 = vperm.xlu0 %1249, %v1232
          %v1251 = vpop.permute.xlu0 %1250
          %1254 = vset.pattern.permute.xlu0 0
          %1255 = vperm.xlu0 %1254, %v1233
          %v1256 = vpop.permute.xlu0 %1255
          %1259 = vset.pattern.permute.xlu0 0
          %1260 = vperm.xlu0 %1259, %v1234
          %v1261 = vpop.permute.xlu0 %1260
          %1264 = vset.pattern.permute.xlu0 0
          %1265 = vperm.xlu0 %1264, %v1235
          %v1266 = vpop.permute.xlu0 %1265
          %1269 = vset.pattern.permute.xlu0 0
          %1270 = vperm.xlu0 %1269, %v1236
          %v1271 = vpop.permute.xlu0 %1270
          %1274 = vset.pattern.permute.xlu0 0
          %1275 = vperm.xlu0 %1274, %v1237
          %v1276 = vpop.permute.xlu0 %1275
          %v1278 = vadd.f32 %v1222, %v1241
          %v1279 = vadd.f32 %v1223, %v1246
          %v1280 = vadd.f32 %v1224, %v1251
          %v1281 = vadd.f32 %v1225, %v1256
          %v1282 = vadd.f32 %v1226, %v1261
          %v1283 = vadd.f32 %v1227, %v1266
          %v1284 = vadd.f32 %v1228, %v1271
          %v1285 = vadd.f32 %v1229, %v1276
          %v1286 = vmul.f32 %v1278, 0.01
          %v1287 = vmul.f32 %v1279, 0.01
          %v1288 = vmul.f32 %v1280, 0.01
          %v1289 = vmul.f32 %v1281, 0.01
          %v1290 = vmul.f32 %v1282, 0.01
          %v1291 = vmul.f32 %v1283, 0.01
          %v1292 = vmul.f32 %v1284, 0.01
          %v1293 = vmul.f32 %v1285, 0.01
          %v1294 = vmax.f32 %v1278, %v1286
          %v1295 = vmax.f32 %v1279, %v1287
          %v1296 = vmax.f32 %v1280, %v1288
          %v1297 = vmax.f32 %v1281, %v1289
          %v1298 = vmax.f32 %v1282, %v1290
          %v1299 = vmax.f32 %v1283, %v1291
          %v1300 = vmax.f32 %v1284, %v1292
          %v1301 = vmax.f32 %v1285, %v1293
          %v1302 = vld [vmem:[%s5] sm:$0xff]
          %v1303 = vld [vmem:[%s5 + $0x8] sm:$0xff]
          %v1304 = vld [vmem:[%s5 + $0x10] sm:$0xff]
          %v1305 = vld [vmem:[%s5 + $0x18] sm:$0xff]
          %v1306 = vld [vmem:[%s5 + $0x20] sm:$0xff]
          %v1307 = vld [vmem:[%s5 + $0x28] sm:$0xff]
          %v1308 = vld [vmem:[%s5 + $0x30] sm:$0xff]
          %v1309 = vld [vmem:[%s5 + $0x38] sm:$0xff]
          %v1310 = vld [vmem:[%s3] sm:$0xff]
          %v1311 = vld [vmem:[%s3 + $0x8] sm:$0xff]
          %v1312 = vld [vmem:[%s3 + $0x10] sm:$0xff]
          %v1313 = vld [vmem:[%s3 + $0x18] sm:$0xff]
          %v1314 = vld [vmem:[%s3 + $0x20] sm:$0xff]
          %v1315 = vld [vmem:[%s3 + $0x28] sm:$0xff]
          %v1316 = vld [vmem:[%s3 + $0x30] sm:$0xff]
          %v1317 = vld [vmem:[%s3 + $0x38] sm:$0xff]
          %v1318 = vld [vmem:[%s4] sm:$0xff]
          %v1319 = vld [vmem:[%s4 + $0x8] sm:$0xff]
          %v1320 = vld [vmem:[%s4 + $0x10] sm:$0xff]
          %v1321 = vld [vmem:[%s4 + $0x18] sm:$0xff]
          %v1322 = vld [vmem:[%s4 + $0x20] sm:$0xff]
          %v1323 = vld [vmem:[%s4 + $0x28] sm:$0xff]
          %v1324 = vld [vmem:[%s4 + $0x30] sm:$0xff]
          %v1325 = vld [vmem:[%s4 + $0x38] sm:$0xff]
          %v1326 = vld [vmem:[%s291] sm:$0xff]
          %v1327 = vld [vmem:[%s291 + $0x8] sm:$0xff]
          %v1328 = vld [vmem:[%s291 + $0x10] sm:$0xff]
          %v1329 = vld [vmem:[%s291 + $0x18] sm:$0xff]
          %v1330 = vld [vmem:[%s291 + $0x20] sm:$0xff]
          %v1331 = vld [vmem:[%s291 + $0x28] sm:$0xff]
          %v1332 = vld [vmem:[%s291 + $0x30] sm:$0xff]
          %v1333 = vld [vmem:[%s291 + $0x38] sm:$0xff]
          %v1334 = vld [vmem:[%s291 + $0x40] sm:$0xff]
          %v1335 = vld [vmem:[%s291 + $0x48] sm:$0xff]
          %v1336 = vld [vmem:[%s291 + $0x50] sm:$0xff]
          %v1337 = vld [vmem:[%s291 + $0x58] sm:$0xff]
          %v1338 = vld [vmem:[%s291 + $0x60] sm:$0xff]
          %v1339 = vld [vmem:[%s291 + $0x68] sm:$0xff]
          %v1340 = vld [vmem:[%s291 + $0x70] sm:$0xff]
          %v1341 = vld [vmem:[%s291 + $0x78] sm:$0xff]
          %vm1342 = vcmask 31744
          %v1344 = vsel %vm1342, %v1318, 0
          %v1347 = vsel %vm1342, %v1319, 0
          %v1350 = vsel %vm1342, %v1320, 0
          %v1353 = vsel %vm1342, %v1321, 0
          %v1356 = vsel %vm1342, %v1322, 0
          %v1359 = vsel %vm1342, %v1323, 0
          %v1362 = vsel %vm1342, %v1324, 0
          %v1365 = vsel %vm1342, %v1325, 0
          %v1368 = vsel %vm1342, %v1326, 0
          %v1371 = vsel %vm1342, %v1327, 0
          %v1374 = vsel %vm1342, %v1328, 0
          %v1377 = vsel %vm1342, %v1329, 0
          %v1380 = vsel %vm1342, %v1330, 0
          %v1383 = vsel %vm1342, %v1331, 0
          %v1386 = vsel %vm1342, %v1332, 0
          %v1389 = vsel %vm1342, %v1333, 0
          %v1392 = vsel %vm1342, %v1334, 0
          %v1395 = vsel %vm1342, %v1335, 0
          %v1398 = vsel %vm1342, %v1336, 0
          %v1401 = vsel %vm1342, %v1337, 0
          %v1404 = vsel %vm1342, %v1338, 0
          %v1407 = vsel %vm1342, %v1339, 0
          %v1410 = vsel %vm1342, %v1340, 0
          %v1413 = vsel %vm1342, %v1341, 0
          %1415 = vmatprep.subr.mxu0 0.0
          %1416 = vmatpush1.xpose.msra.mxu0 %v1368
          %1417 = vmatprep.subr.mxu0 0.0
          %1418 = vmatpush1.xpose.msra.mxu0 %v1371
          %1419 = vmatprep.subr.mxu0 0.0
          %1420 = vmatpush1.xpose.msra.mxu0 %v1374
          %1421 = vmatprep.subr.mxu0 0.0
          %1422 = vmatpush1.xpose.msra.mxu0 %v1377
          %1423 = vmatprep.subr.mxu0 0.0
          %1424 = vmatpush1.xpose.msra.mxu0 %v1380
          %1425 = vmatprep.subr.mxu0 0.0
          %1426 = vmatpush1.xpose.msra.mxu0 %v1383
          %1427 = vmatprep.subr.mxu0 0.0
          %1428 = vmatpush1.xpose.msra.mxu0 %v1386
          %1429 = vmatprep.subr.mxu0 0.0
          %1430 = vmatpush1.xpose.msra.mxu0 %v1389
          %1431 = vmatprep.subr.mxu0 0.0
          %1432 = vmatpush1.xpose.msra.mxu0 %v1392
          %1433 = vmatprep.subr.mxu0 0.0
          %1434 = vmatpush1.xpose.msra.mxu0 %v1395
          %1435 = vmatprep.subr.mxu0 0.0
          %1436 = vmatpush1.xpose.msra.mxu0 %v1398
          %1437 = vmatprep.subr.mxu0 0.0
          %1438 = vmatpush1.xpose.msra.mxu0 %v1401
          %1439 = vmatprep.subr.mxu0 0.0
          %1440 = vmatpush1.xpose.msra.mxu0 %v1404
          %1441 = vmatprep.subr.mxu0 0.0
          %1442 = vmatpush1.xpose.msra.mxu0 %v1407
          %1443 = vmatprep.subr.mxu0 0.0
          %1444 = vmatpush1.xpose.msra.mxu0 %v1410
          %1445 = vmatprep.subr.mxu0 0.0
          %1446 = vmatpush1.xpose.msra.mxu0 %v1413
          %1447 = vmatprep.subr.mxu0 0.0
          %1448 = vmatpush1.xpose.msra.mxu0 0.0
          %1449 = vmatprep.subr.mxu0 0.0
          %1450 = vmatpush1.xpose.msra.mxu0 0.0
          %1451 = vmatprep.subr.mxu0 0.0
          %1452 = vmatpush1.xpose.msra.mxu0 0.0
          %1453 = vmatprep.subr.mxu0 0.0
          %1454 = vmatpush1.xpose.msra.mxu0 0.0
          %1455 = vmatprep.subr.mxu0 0.0
          %1456 = vmatpush1.xpose.msra.mxu0 0.0
          %1457 = vmatprep.subr.mxu0 0.0
          %1458 = vmatpush1.xpose.msra.mxu0 0.0
          %1459 = vmatprep.subr.mxu0 0.0
          %1460 = vmatpush1.xpose.msra.mxu0 0.0
          %1461 = vmatprep.subr.mxu0 0.0
          %1462 = vmatpush1.xpose.msra.mxu0 0.0
          %1463 = vmatprep.subr.mxu0 0.0
          %1464 = vmatpush1.xpose.msra.mxu0 0.0
          %1465 = vmatprep.subr.mxu0 0.0
          %1466 = vmatpush1.xpose.msra.mxu0 0.0
          %1467 = vmatprep.subr.mxu0 0.0
          %1468 = vmatpush1.xpose.msra.mxu0 0.0
          %1469 = vmatprep.subr.mxu0 0.0
          %1470 = vmatpush1.xpose.msra.mxu0 0.0
          %1471 = vmatprep.subr.mxu0 0.0
          %1472 = vmatpush1.xpose.msra.mxu0 0.0
          %1473 = vmatprep.subr.mxu0 0.0
          %1474 = vmatpush1.xpose.msra.mxu0 0.0
          %1475 = vmatprep.subr.mxu0 0.0
          %1476 = vmatpush1.xpose.msra.mxu0 0.0
          %1477 = vmatprep.subr.mxu0 0.0
          %1478 = vmatpush1.xpose.msra.mxu0 0.0
          %1479 = vmatprep.mubr.f32.mxu0 0.0
          %1480 = vmatmul.mubr.f32.gmra.mrb[0].mxu0 %v1344
          %v1481 = vpop.f32.mrb[0].mxu0
          %v1482 = vadd.f32 0.0, %v1481
          %v1483 = vpop.f32.mrb[0].mxu0
          %1484 = vmatprep.mubr.f32.mxu0 0.0
          %1485 = vmatmul.mubr.f32.gmra.mrb[0].mxu0 %v1347
          %v1486 = vpop.f32.mrb[0].mxu0
          %v1487 = vadd.f32 0.0, %v1486
          %v1488 = vpop.f32.mrb[0].mxu0
          %1489 = vmatprep.mubr.f32.mxu0 0.0
          %1490 = vmatmul.mubr.f32.gmra.mrb[0].mxu0 %v1350
          %v1491 = vpop.f32.mrb[0].mxu0
          %v1492 = vadd.f32 0.0, %v1491
          %v1493 = vpop.f32.mrb[0].mxu0
          %1494 = vmatprep.mubr.f32.mxu0 0.0
          %1495 = vmatmul.mubr.f32.gmra.mrb[0].mxu0 %v1353
          %v1496 = vpop.f32.mrb[0].mxu0
          %v1497 = vadd.f32 0.0, %v1496
          %v1498 = vpop.f32.mrb[0].mxu0
          %1499 = vmatprep.mubr.f32.mxu0 0.0
          %1500 = vmatmul.mubr.f32.gmra.mrb[0].mxu0 %v1356
          %v1501 = vpop.f32.mrb[0].mxu0
          %v1502 = vadd.f32 0.0, %v1501
          %v1503 = vpop.f32.mrb[0].mxu0
          %1504 = vmatprep.mubr.f32.mxu0 0.0
          %1505 = vmatmul.mubr.f32.gmra.mrb[0].mxu0 %v1359
          %v1506 = vpop.f32.mrb[0].mxu0
          %v1507 = vadd.f32 0.0, %v1506
          %v1508 = vpop.f32.mrb[0].mxu0
          %1509 = vmatprep.mubr.f32.mxu0 0.0
          %1510 = vmatmul.mubr.f32.gmra.mrb[0].mxu0 %v1362
          %v1511 = vpop.f32.mrb[0].mxu0
          %v1512 = vadd.f32 0.0, %v1511
          %v1513 = vpop.f32.mrb[0].mxu0
          %1514 = vmatprep.mubr.f32.mxu0 0.0
          %1515 = vmatmul.mubr.f32.gmra.mrb[0].mxu0 %v1365
          %v1516 = vpop.f32.mrb[0].mxu0
          %v1517 = vadd.f32 0.0, %v1516
          %v1518 = vpop.f32.mrb[0].mxu0
          %1519 = vdwg.mxu0
          %vm1520 = vcmask 523264
          %v1522 = vsel %vm1520, %v1310, 0
          %v1525 = vsel %vm1520, %v1311, 0
          %v1528 = vsel %vm1520, %v1312, 0
          %v1531 = vsel %vm1520, %v1313, 0
          %v1534 = vsel %vm1520, %v1314, 0
          %v1537 = vsel %vm1520, %v1315, 0
          %v1540 = vsel %vm1520, %v1316, 0
          %v1543 = vsel %vm1520, %v1317, 0
          %1545 = vmatprep.subr.mxu0 0.0
          %1546 = vmatpush1.msra.mxu0 %v1294
          %1547 = vmatprep.subr.mxu0 0.0
          %1548 = vmatpush1.msra.mxu0 %v1295
          %1549 = vmatprep.subr.mxu0 0.0
          %1550 = vmatpush1.msra.mxu0 %v1296
          %1551 = vmatprep.subr.mxu0 0.0
          %1552 = vmatpush1.msra.mxu0 %v1297
          %1553 = vmatprep.subr.mxu0 0.0
          %1554 = vmatpush1.msra.mxu0 %v1298
          %1555 = vmatprep.subr.mxu0 0.0
          %1556 = vmatpush1.msra.mxu0 %v1299
          %1557 = vmatprep.subr.mxu0 0.0
          %1558 = vmatpush1.msra.mxu0 %v1300
          %1559 = vmatprep.subr.mxu0 0.0
          %1560 = vmatpush1.msra.mxu0 %v1301
          %1561 = vmatprep.subr.mxu0 0.0
          %1562 = vmatpush1.msra.mxu0 0.0
          %1563 = vmatprep.subr.mxu0 0.0
          %1564 = vmatpush1.msra.mxu0 0.0
          %1565 = vmatprep.subr.mxu0 0.0
          %1566 = vmatpush1.msra.mxu0 0.0
          %1567 = vmatprep.subr.mxu0 0.0
          %1568 = vmatpush1.msra.mxu0 0.0
          %1569 = vmatprep.subr.mxu0 0.0
          %1570 = vmatpush1.msra.mxu0 0.0
          %1571 = vmatprep.subr.mxu0 0.0
          %1572 = vmatpush1.msra.mxu0 0.0
          %1573 = vmatprep.subr.mxu0 0.0
          %1574 = vmatpush1.msra.mxu0 0.0
          %1575 = vmatprep.subr.mxu0 0.0
          %1576 = vmatpush1.msra.mxu0 0.0
          %1577 = vmatprep.subr.mxu0 0.0
          %1578 = vmatpush1.msra.mxu0 0.0
          %1579 = vmatprep.subr.mxu0 0.0
          %1580 = vmatpush1.msra.mxu0 0.0
          %1581 = vmatprep.subr.mxu0 0.0
          %1582 = vmatpush1.msra.mxu0 0.0
          %1583 = vmatprep.subr.mxu0 0.0
          %1584 = vmatpush1.msra.mxu0 0.0
          %1585 = vmatprep.subr.mxu0 0.0
          %1586 = vmatpush1.msra.mxu0 0.0
          %1587 = vmatprep.subr.mxu0 0.0
          %1588 = vmatpush1.msra.mxu0 0.0
          %1589 = vmatprep.subr.mxu0 0.0
          %1590 = vmatpush1.msra.mxu0 0.0
          %1591 = vmatprep.subr.mxu0 0.0
          %1592 = vmatpush1.msra.mxu0 0.0
          %1593 = vmatprep.subr.mxu0 0.0
          %1594 = vmatpush1.msra.mxu0 0.0
          %1595 = vmatprep.subr.mxu0 0.0
          %1596 = vmatpush1.msra.mxu0 0.0
          %1597 = vmatprep.subr.mxu0 0.0
          %1598 = vmatpush1.msra.mxu0 0.0
          %1599 = vmatprep.subr.mxu0 0.0
          %1600 = vmatpush1.msra.mxu0 0.0
          %1601 = vmatprep.subr.mxu0 0.0
          %1602 = vmatpush1.msra.mxu0 0.0
          %1603 = vmatprep.subr.mxu0 0.0
          %1604 = vmatpush1.msra.mxu0 0.0
          %1605 = vmatprep.subr.mxu0 0.0
          %1606 = vmatpush1.msra.mxu0 0.0
          %1607 = vmatprep.subr.mxu0 0.0
          %1608 = vmatpush1.msra.mxu0 0.0
          %1609 = vmatprep.mubr.f32.mxu0 0.0
          %1610 = vmatmul.mubr.f32.gmra.mrb[0].mxu0 %v1522
          %v1611 = vpop.f32.mrb[0].mxu0
          %v1612 = vadd.f32 %v1482, %v1611
          %v1613 = vpop.f32.mrb[0].mxu0
          %1614 = vmatprep.mubr.f32.mxu0 0.0
          %1615 = vmatmul.mubr.f32.gmra.mrb[0].mxu0 %v1525
          %v1616 = vpop.f32.mrb[0].mxu0
          %v1617 = vadd.f32 %v1487, %v1616
          %v1618 = vpop.f32.mrb[0].mxu0
          %1619 = vmatprep.mubr.f32.mxu0 0.0
          %1620 = vmatmul.mubr.f32.gmra.mrb[0].mxu0 %v1528
          %v1621 = vpop.f32.mrb[0].mxu0
          %v1622 = vadd.f32 %v1492, %v1621
          %v1623 = vpop.f32.mrb[0].mxu0
          %1624 = vmatprep.mubr.f32.mxu0 0.0
          %1625 = vmatmul.mubr.f32.gmra.mrb[0].mxu0 %v1531
          %v1626 = vpop.f32.mrb[0].mxu0
          %v1627 = vadd.f32 %v1497, %v1626
          %v1628 = vpop.f32.mrb[0].mxu0
          %1629 = vmatprep.mubr.f32.mxu0 0.0
          %1630 = vmatmul.mubr.f32.gmra.mrb[0].mxu0 %v1534
          %v1631 = vpop.f32.mrb[0].mxu0
          %v1632 = vadd.f32 %v1502, %v1631
          %v1633 = vpop.f32.mrb[0].mxu0
          %1634 = vmatprep.mubr.f32.mxu0 0.0
          %1635 = vmatmul.mubr.f32.gmra.mrb[0].mxu0 %v1537
          %v1636 = vpop.f32.mrb[0].mxu0
          %v1637 = vadd.f32 %v1507, %v1636
          %v1638 = vpop.f32.mrb[0].mxu0
          %1639 = vmatprep.mubr.f32.mxu0 0.0
          %1640 = vmatmul.mubr.f32.gmra.mrb[0].mxu0 %v1540
          %v1641 = vpop.f32.mrb[0].mxu0
          %v1642 = vadd.f32 %v1512, %v1641
          %v1643 = vpop.f32.mrb[0].mxu0
          %1644 = vmatprep.mubr.f32.mxu0 0.0
          %1645 = vmatmul.mubr.f32.gmra.mrb[0].mxu0 %v1543
          %v1646 = vpop.f32.mrb[0].mxu0
          %v1647 = vadd.f32 %v1517, %v1646
          %v1648 = vpop.f32.mrb[0].mxu0
          %1649 = vdwg.mxu0
          %1651 = vset.pattern.permute.xlu0 3
          %1652 = vperm.xlu0 %1651, %v1302
          %v1653 = vpop.permute.xlu0 %1652
          %1656 = vset.pattern.permute.xlu0 3
          %1657 = vperm.xlu0 %1656, %v1303
          %v1658 = vpop.permute.xlu0 %1657
          %1661 = vset.pattern.permute.xlu0 3
          %1662 = vperm.xlu0 %1661, %v1304
          %v1663 = vpop.permute.xlu0 %1662
          %1666 = vset.pattern.permute.xlu0 3
          %1667 = vperm.xlu0 %1666, %v1305
          %v1668 = vpop.permute.xlu0 %1667
          %1671 = vset.pattern.permute.xlu0 3
          %1672 = vperm.xlu0 %1671, %v1306
          %v1673 = vpop.permute.xlu0 %1672
          %1676 = vset.pattern.permute.xlu0 3
          %1677 = vperm.xlu0 %1676, %v1307
          %v1678 = vpop.permute.xlu0 %1677
          %1681 = vset.pattern.permute.xlu0 3
          %1682 = vperm.xlu0 %1681, %v1308
          %v1683 = vpop.permute.xlu0 %1682
          %1686 = vset.pattern.permute.xlu0 3
          %1687 = vperm.xlu0 %1686, %v1309
          %v1688 = vpop.permute.xlu0 %1687
          %v1690 = vadd.f32 %v1612, %v1653
          %v1691 = vadd.f32 %v1617, %v1658
          %v1692 = vadd.f32 %v1622, %v1663
          %v1693 = vadd.f32 %v1627, %v1668
          %v1694 = vadd.f32 %v1632, %v1673
          %v1695 = vadd.f32 %v1637, %v1678
          %v1696 = vadd.f32 %v1642, %v1683
          %v1697 = vadd.f32 %v1647, %v1688
          %v1698 = vmul.f32 %v1690, 0.01
          %v1699 = vmul.f32 %v1691, 0.01
          %v1700 = vmul.f32 %v1692, 0.01
          %v1701 = vmul.f32 %v1693, 0.01
          %v1702 = vmul.f32 %v1694, 0.01
          %v1703 = vmul.f32 %v1695, 0.01
          %v1704 = vmul.f32 %v1696, 0.01
          %v1705 = vmul.f32 %v1697, 0.01
          %v1706 = vmax.f32 %v1690, %v1698
          %v1707 = vmax.f32 %v1691, %v1699
          %v1708 = vmax.f32 %v1692, %v1700
          %v1709 = vmax.f32 %v1693, %v1701
          %v1710 = vmax.f32 %v1694, %v1702
          %v1711 = vmax.f32 %v1695, %v1703
          %v1712 = vmax.f32 %v1696, %v1704
          %v1713 = vmax.f32 %v1697, %v1705
          %v1714 = vld [vmem:[%s5] sm:$0x1]
          %1715 = vset.pattern.permute.xlu0 4
          %1716 = vperm.xlu0 %1715, %v1302
          %v1717 = vpop.permute.xlu0 %1716
          %1719 = vset.pattern.permute.xlu0 4
          %1720 = vperm.xlu0 %1719, %v1303
          %v1721 = vpop.permute.xlu0 %1720
          %1723 = vset.pattern.permute.xlu0 4
          %1724 = vperm.xlu0 %1723, %v1304
          %v1725 = vpop.permute.xlu0 %1724
          %1727 = vset.pattern.permute.xlu0 4
          %1728 = vperm.xlu0 %1727, %v1305
          %v1729 = vpop.permute.xlu0 %1728
          %1731 = vset.pattern.permute.xlu0 4
          %1732 = vperm.xlu0 %1731, %v1306
          %v1733 = vpop.permute.xlu0 %1732
          %1735 = vset.pattern.permute.xlu0 4
          %1736 = vperm.xlu0 %1735, %v1307
          %v1737 = vpop.permute.xlu0 %1736
          %1739 = vset.pattern.permute.xlu0 4
          %1740 = vperm.xlu0 %1739, %v1308
          %v1741 = vpop.permute.xlu0 %1740
          %1743 = vset.pattern.permute.xlu0 4
          %1744 = vperm.xlu0 %1743, %v1309
          %v1745 = vpop.permute.xlu0 %1744
          %v1747 = vmul.f32 %v1706, %v1717
          %v1748 = vmul.f32 %v1707, %v1721
          %v1749 = vmul.f32 %v1708, %v1725
          %v1750 = vmul.f32 %v1709, %v1729
          %v1751 = vmul.f32 %v1710, %v1733
          %v1752 = vmul.f32 %v1711, %v1737
          %v1753 = vmul.f32 %v1712, %v1741
          %v1754 = vmul.f32 %v1713, %v1745
          %v1755 = vadd.f32 %v1747, %v1748
          %v1756 = vadd.f32 %v1755, %v1749
          %v1757 = vadd.f32 %v1756, %v1750
          %v1758 = vadd.f32 %v1757, %v1751
          %v1759 = vadd.f32 %v1758, %v1752
          %v1760 = vadd.f32 %v1759, %v1753
          %v1761 = vadd.f32 %v1760, %v1754
          %v1762 = vrot.slane %v1761, 4
          %v1763 = vadd.f32 %v1761, %v1762
          %v1764 = vrot.slane %v1763, 2
          %v1765 = vadd.f32 %v1763, %v1764
          %v1766 = vrot.slane %v1765, 1
          %v1767 = vadd.f32 %v1765, %v1766
          %1769 = vset.pattern.permute.xlu0 5
          %1770 = vperm.xlu0 %1769, %v1714
          %v1771 = vpop.permute.xlu0 %1770
          %v1773 = vadd.f32 %v1767, %v1771
          %1774 = vst [vmem:[%s279] sm:$0x1] %v1773
        $region56: #{tpu_custom_call.1} parent=43 // pred_fallthru
          _
        %s1775 = sand.u32 %s180, 1
        %s1776 = scalar_lea.sflag [#allocation7], %s1775
        %s1777 = sand.u32 %s180, 1
        %s1778 = scalar_lea.vmem [#allocation6], %s1777
        // Predicated region
        $region61: #{tpu_custom_call.1} parent=43 // pred_check
          %p1779 = pneg %p190
        $region62: #{tpu_custom_call.1} parent=43 // pred_check_branch
          %1781 = sbr.rel (%p1779) target = $region64
        $region63: #{tpu_custom_call.1} parent=43 // pred_region
          %s1782 = smul.u32 %s25, %s24
          %s1784 = ssub.s32 16, 16
          %1785 = vsyncadd %s1776, %s1784
          %s1786 = smul.addr %s1782, 16
          %s1787 = scalar_lea.hbm %s6, %s1786
          %s1789 = sshll.u32 %s1778, 4
          %s1790 = int_to_ptr.vmem [resolvable:$true] %s1789
          %1792 = dma.vmem_to_hbm [thread:$0]  %s1790, 16, %s1787, %s1776
        $region64: #{tpu_custom_call.1} parent=43 // pred_fallthru
          _
      $region44: #{tpu_custom_call.1} parent=5 // pred_fallthru
        _
      %p1793 = scmp.le.s32.totalorder 2, %s15
      // Predicated region
      $region65: #{tpu_custom_call.1} parent=5 // pred_check
        %p1794 = pneg %p1793
      $region66: #{tpu_custom_call.1} parent=5 // pred_check_branch
        %1796 = sbr.rel (%p1794) target = $region68
      $region67: #{tpu_custom_call.1} parent=5 // pred_region
        %s1797 = ssub.s32 %s15, 2
        // Predicated region
        $region69: #{tpu_custom_call.1} parent=67 // pred_check
          %p1798 = pneg %p196
        $region70: #{tpu_custom_call.1} parent=67 // pred_check_branch
          %1800 = sbr.rel (%p1798) target = $region72
        $region71: #{tpu_custom_call.1} parent=67 // pred_region
          %s1801 = sand.u32 %s181, 1
          %s1802 = scalar_lea.sflag [#allocation7], %s1801
          %s1803 = sand.u32 %s181, 1
          %s1804 = scalar_lea.vmem [#allocation6], %s1803
          %1805 = dma.done %s1802, 16
        $region72: #{tpu_custom_call.1} parent=67 // pred_fallthru
          _
      $region68: #{tpu_custom_call.1} parent=5 // pred_fallthru
        _
    $region6: #{tpu_custom_call.1} parent=1 // loop_footer
      %s19 = sadd.s32 1, %s15
    $region7: #{tpu_custom_call.1} parent=1 // loop_footer_branch
      %14 = sbr.rel target = $region3
    $region8: #{tpu_custom_call.1} parent=1 // loop_exit
      _
    %1806 = vsyncpa [#allocation7], 1
    %s1807 = scalar_lea.sflag [#allocation7], 1
    %1808 = vsyncpa %s1807, 1

</llo_original>
